<compile_context>
chip_gen: v7x
topology: tpu7x:2x2x1
jax: 0.10.0
libtpu: 0.0.40
codegen_flags: <defaults>
</compile_context>

<pallas_src>
import functools

import jax
import jax.numpy as jnp
from jax.experimental import pallas as pl
from jax.experimental.pallas import tpu as pltpu


_TWO_SQRT_2_OVER_PI = 1.5957691216057308  # 2 * sqrt(2/pi)


def _gelu_tanh(h):
    # tanh-approx GELU via the sigmoid identity:
    #   0.5*h*(1 + tanh(u)) == h * sigmoid(2*u),  u = sqrt(2/pi)*(h + 0.044715*h^3)
    # Exactly matches torch.nn.functional.gelu(..., approximate='tanh').
    hh = h * h
    v = jnp.float32(_TWO_SQRT_2_OVER_PI) * h * (1.0 + jnp.float32(0.044715) * hh)
    return h * jax.nn.sigmoid(v)


def _mlp_resident_kernel(x_ref, w1_ref, b1_ref, w2_ref, b2_ref, o_ref, *, compute_dtype):
    # Weights / biases are fully VMEM-resident (constant index_maps -> fetched once);
    # only the x / out row tiles stream from HBM across the row grid.
    x = x_ref[...].astype(compute_dtype)
    h = jnp.dot(x, w1_ref[...], preferred_element_type=jnp.float32)
    h = h + b1_ref[...].astype(jnp.float32)
    g = _gelu_tanh(h)
    acc = jnp.dot(g.astype(compute_dtype), w2_ref[...],
                  preferred_element_type=jnp.float32)
    o_ref[...] = (acc + b2_ref[...].astype(jnp.float32)).astype(o_ref.dtype)


def _mlp_chunked_kernel(x_ref, w1_ref, b1_ref, w2_ref, b2_ref, o_ref, acc_ref, *,
                        compute_dtype):
    # Fallback when W1/W2 don't fit VMEM: stream L-chunks of the weights and
    # accumulate partial second-layer products into a resident f32 accumulator.
    lk = pl.program_id(1)

    @pl.when(lk == 0)
    def _():
        # Seed with b2 so no epilogue bias add is needed.
        acc_ref[...] = jnp.broadcast_to(b2_ref[...].astype(jnp.float32), acc_ref.shape)

    x = x_ref[...].astype(compute_dtype)
    h = jnp.dot(x, w1_ref[...], preferred_element_type=jnp.float32)
    h = h + b1_ref[...].astype(jnp.float32)
    g = _gelu_tanh(h)
    acc_ref[...] += jnp.dot(g.astype(compute_dtype), w2_ref[...],
                            preferred_element_type=jnp.float32)

    @pl.when(lk == pl.num_programs(1) - 1)
    def _():
        o_ref[...] = acc_ref[...].astype(o_ref.dtype)


def _round_up(x, m):
    return ((x + m - 1) // m) * m


def _vmem_budget_bytes():
    """Generation-aware usable-VMEM budget (leaves compiler-scratch headroom)."""
    phys = 128 * 1024 * 1024
    try:
        info = pltpu.get_tpu_info()
        phys = int(getattr(info, "vmem_capacity_bytes", phys))
    except Exception:
        pass
    # ~102 MiB on 128 MiB chips (v5e/v6e), ~51 MiB on 64 MiB chips (v7x).
    return int(phys * 0.80)


def _resident_need(tm, D, L, isz, osz, wsz):
    return (
        2 * (2 * D * L * wsz)          # W1 + W2 (assume 2 pipeline buffers each)
        + 2 * (L + D) * 4              # biases (padded, tiny)
        + 2 * tm * D * isz             # double-buffered x tile
        + 2 * tm * D * osz             # double-buffered out tile
        + 3 * tm * L * 4               # live f32 h / GELU intermediates
        + tm * L * wsz                 # g cast to MXU dtype
        + tm * D * 4                   # f32 result before output cast
    )


def _chunked_need(tm, tl, D, isz, osz, wsz):
    return (
        2 * D * tl * wsz + 2 * tl * D * wsz   # double-buffered W1 / W2 chunks
        + 2 * (tl + D) * 4                    # bias chunks
        + 2 * tm * D * isz + 2 * tm * D * osz # x / out tiles
        + tm * D * 4                          # resident f32 accumulator
        + 3 * tm * tl * 4 + tm * tl * wsz     # live intermediates
    )


def _pick_row_tile(M, cap, fits):
    """Largest multiple-of-8 row tile <= cap that fits VMEM; prefer tm | M."""
    hi = max(8, min((cap // 8) * 8, _round_up(M, 8)))
    tm_fit = None
    t = hi
    while t >= 8:
        if fits(t):
            tm_fit = t
            break
        t -= 8
    if tm_fit is None:
        return None
    # Prefer a tm that divides M so the wrapper never pads/copies x in HBM,
    # unless that would shrink the tile by more than 4x.
    floor = max(8, tm_fit // 4)
    t = tm_fit
    while t >= floor:
        if M % t == 0:
            return t
        t -= 8
    return tm_fit


def vision_mlp(x, w1, b1, w2, b2, *, tm=None, tl=None, mxu_dtype=jnp.bfloat16,
               row_tile_cap=512):
    """Fused VisionMLP forward.

    x:  [B, S, D]
    w1: [D, L]  (pre-transposed from PyTorch's (out, in) layout),  b1: [L]
    w2: [L, D],  b2: [D]
    mxu_dtype: operand dtype fed to the MXU (f32 accumulation).  bf16 by default
               (native MXU path); pass jnp.float32 for exact-f32 matmuls.
    """
    B, S, D = x.shape
    Din, L = w1.shape
    assert Din == D and w2.shape == (L, D) and b1.shape == (L,) and b2.shape == (D,)

    compute_dtype = jnp.dtype(mxu_dtype) if mxu_dtype is not None else x.dtype
    # One-time boundary cast of the weights: halves their HBM traffic and lets
    # the MXU run native bf16 instead of a multi-pass f32 decomposition.
    w1 = w1.astype(compute_dtype)
    w2 = w2.astype(compute_dtype)

    M = B * S
    isz = x.dtype.itemsize
    osz = x.dtype.itemsize
    wsz = jnp.dtype(compute_dtype).itemsize
    budget = _vmem_budget_bytes()

    # ---------------- schedule selection ----------------
    resident = False
    if tl is None or tl >= L:
        if tm is not None:
            resident = _resident_need(tm, D, L, isz, osz, wsz) <= budget
        else:
            tm_try = _pick_row_tile(
                M, row_tile_cap,
                lambda t: _resident_need(t, D, L, isz, osz, wsz) <= budget)
            resident = tm_try is not None
            if resident:
                tm = tm_try

    Lpad = L
    if not resident:
        if tl is None or tl >= L:
            tl = min(1024, _round_up(L, 128))
        tl = max(128, (tl // 128) * 128)
        while tl > 128 and _chunked_need(8, tl, D, isz, osz, wsz) > budget:
            tl -= 128
        if tm is None:
            tm = _pick_row_tile(
                M, row_tile_cap,
                lambda t: _chunked_need(t, tl, D, isz, osz, wsz) <= budget)
            if tm is None:
                tm = 8
        # Pad L so the chunk divides it (zero cols of W1 / rows of W2 / b1 entries
        # contribute exactly 0 to the output).
        Lpad = _round_up(L, tl)
        if Lpad != L:
            w1 = jnp.pad(w1, ((0, 0), (0, Lpad - L)))
            w2 = jnp.pad(w2, ((0, Lpad - L), (0, 0)))
            b1 = jnp.pad(b1, ((0, Lpad - L),))

    # ---------------- row padding (usually avoided by the tile picker) ----------
    Mp = pl.cdiv(M, tm) * tm
    x2 = x.reshape(M, D)
    if Mp != M:
        x2 = jnp.pad(x2, ((0, Mp - M), (0, 0)))

    b1_2 = b1.reshape(1, Lpad)
    b2_2 = b2.reshape(1, D)

    vmem_limit = budget

    flops = 4 * Mp * D * Lpad
    trans = Mp * Lpad
    weight_bytes = 2 * D * Lpad * wsz + (Lpad + D) * b1.dtype.itemsize
    if resident:
        bytes_accessed = 2 * Mp * D * isz + weight_bytes
    else:
        bytes_accessed = 2 * Mp * D * isz + (Mp // tm) * weight_bytes
    cost = pl.CostEstimate(flops=int(flops), transcendentals=int(trans),
                           bytes_accessed=int(bytes_accessed))

    if resident:
        kern = functools.partial(_mlp_resident_kernel, compute_dtype=compute_dtype)
        out = pl.pallas_call(
            kern,
            out_shape=jax.ShapeDtypeStruct((Mp, D), x.dtype),
            grid_spec=pltpu.PrefetchScalarGridSpec(
                num_scalar_prefetch=0,
                grid=(Mp // tm,),
                in_specs=[
                    pl.BlockSpec((tm, D), lambda i: (i, 0)),      # x row tile (streams)
                    pl.BlockSpec((D, Lpad), lambda i: (0, 0)),    # W1 (resident)
                    pl.BlockSpec((1, Lpad), lambda i: (0, 0)),    # b1 (resident)
                    pl.BlockSpec((Lpad, D), lambda i: (0, 0)),    # W2 (resident)
                    pl.BlockSpec((1, D), lambda i: (0, 0)),       # b2 (resident)
                ],
                out_specs=pl.BlockSpec((tm, D), lambda i: (i, 0)),
            ),
            compiler_params=pltpu.CompilerParams(
                dimension_semantics=("parallel",),
                vmem_limit_bytes=vmem_limit,
            ),
            cost_estimate=cost,
        )(x2, w1, b1_2, w2, b2_2)
    else:
        kern = functools.partial(_mlp_chunked_kernel, compute_dtype=compute_dtype)
        out = pl.pallas_call(
            kern,
            out_shape=jax.ShapeDtypeStruct((Mp, D), x.dtype),
            grid_spec=pltpu.PrefetchScalarGridSpec(
                num_scalar_prefetch=0,
                grid=(Mp // tm, Lpad // tl),
                in_specs=[
                    pl.BlockSpec((tm, D), lambda i, l: (i, 0)),   # x row tile
                    pl.BlockSpec((D, tl), lambda i, l: (0, l)),   # W1 column chunk
                    pl.BlockSpec((1, tl), lambda i, l: (0, l)),   # b1 chunk
                    pl.BlockSpec((tl, D), lambda i, l: (l, 0)),   # W2 row chunk
                    pl.BlockSpec((1, D), lambda i, l: (0, 0)),    # b2
                ],
                out_specs=pl.BlockSpec((tm, D), lambda i, l: (i, 0)),
                scratch_shapes=[pltpu.VMEM((tm, D), jnp.float32)],
            ),
            compiler_params=pltpu.CompilerParams(
                dimension_semantics=("parallel", "arbitrary"),
                vmem_limit_bytes=vmem_limit,
            ),
            cost_estimate=cost,
        )(x2, w1, b1_2, w2, b2_2)

    if Mp != M:
        out = out[:M]
    return out.reshape(B, S, D)


def _reference(x, w1, b1, w2, b2):
    """Pure-f32 reference of Linear -> GELU(tanh) -> Linear from the given params."""
    xf = x.astype(jnp.float32)
    w1f = w1.astype(jnp.float32)
    w2f = w2.astype(jnp.float32)
    b1f = b1.astype(jnp.float32)
    b2f = b2.astype(jnp.float32)
    h = jnp.einsum("bsd,dl->bsl", xf, w1f, precision=jax.lax.Precision.HIGHEST) + b1f
    c = jnp.float32(0.7978845608028654)
    g = 0.5 * h * (1.0 + jnp.tanh(c * (h + 0.044715 * h ** 3)))
    return jnp.einsum("bsl,ld->bsd", g, w2f, precision=jax.lax.Precision.HIGHEST) + b2f


if __name__ == "__main__":
    # Small, lane-dense config keeping the module's linear_dimension = 4 * vector_dimension
    # ratio: D=128, L=512, batch=2, seq=64.  bf16 params/activations (native MXU path).
    B, S, D, L = 2, 64, 128, 512

    key = jax.random.PRNGKey(0)
    kx, kw1, kb1, kw2, kb2 = jax.random.split(key, 5)

    x = jax.random.normal(kx, (B, S, D), dtype=jnp.float32).astype(jnp.bfloat16)

    # nn.Linear-style init: U(-1/sqrt(fan_in), 1/sqrt(fan_in)); weights stored
    # pre-transposed relative to PyTorch's (out, in) layout.
    bound1 = 1.0 / jnp.sqrt(jnp.float32(D))
    w1 = jax.random.uniform(kw1, (D, L), jnp.float32, -bound1, bound1).astype(jnp.bfloat16)
    b1 = jax.random.uniform(kb1, (L,), jnp.float32, -bound1, bound1).astype(jnp.bfloat16)
    bound2 = 1.0 / jnp.sqrt(jnp.float32(L))
    w2 = jax.random.uniform(kw2, (L, D), jnp.float32, -bound2, bound2).astype(jnp.bfloat16)
    b2 = jax.random.uniform(kb2, (D,), jnp.float32, -bound2, bound2).astype(jnp.bfloat16)

    out = jax.block_until_ready(vision_mlp(x, w1, b1, w2, b2))

    ref = _reference(x, w1, b1, w2, b2)
    assert out.shape == (B, S, D) and out.dtype == x.dtype
    err = float(jnp.max(jnp.abs(out.astype(jnp.float32) - ref)))
    assert err < 2e-2, err

    print("KERNEL_OK")
</pallas_src>

<mosaic_0001>
module attributes {stable_mosaic.version = 11 : i64} {
  func.func @_mlp_resident_kernel(%arg0: i32, %arg1: memref<128x128xbf16, #tpu.memory_space<vmem>>, %arg2: memref<128x512xbf16, #tpu.memory_space<vmem>>, %arg3: memref<1x512xbf16, #tpu.memory_space<vmem>>, %arg4: memref<512x128xbf16, #tpu.memory_space<vmem>>, %arg5: memref<1x128xbf16, #tpu.memory_space<vmem>>, %arg6: memref<128x128xbf16, #tpu.memory_space<vmem>>) attributes {dimension_semantics = [#tpu.dimension_semantics<parallel>], iteration_bounds = array<i64: 1>, scalar_prefetch = 0 : i64, scratch_operands = 0 : i64, tpu.core_type = #tpu.core_type<tc>, window_params = [{transform_indices = @transform_0, window_bounds = array<i64: 128, 128>}, {pipeline_mode = #tpu.pipeline_mode<synchronous>, transform_indices = @transform_1, window_bounds = array<i64: 128, 512>}, {pipeline_mode = #tpu.pipeline_mode<synchronous>, transform_indices = @transform_2, window_bounds = array<i64: 1, 512>}, {pipeline_mode = #tpu.pipeline_mode<synchronous>, transform_indices = @transform_3, window_bounds = array<i64: 512, 128>}, {pipeline_mode = #tpu.pipeline_mode<synchronous>, transform_indices = @transform_4, window_bounds = array<i64: 1, 128>}, {transform_indices = @transform_5, window_bounds = array<i64: 128, 128>}]} {
    %c0 = arith.constant 0 : index
    %c0_0 = arith.constant 0 : index
    %0 = vector.load %arg1[%c0, %c0_0] : memref<128x128xbf16, #tpu.memory_space<vmem>>, vector<128x128xbf16>
    %c0_1 = arith.constant 0 : index
    %c0_2 = arith.constant 0 : index
    %1 = vector.load %arg2[%c0_1, %c0_2] : memref<128x512xbf16, #tpu.memory_space<vmem>>, vector<128x512xbf16>
    %cst = arith.constant dense<0.000000e+00> : vector<128x512xf32>
    %2 = tpu.matmul %0, %1, %cst {dimension_numbers = #tpu.dot_dimension_numbers<[1], [0], [0], [1], [0, 0, 1, 1], [], []>} : vector<128x128xbf16>, vector<128x512xbf16>, vector<128x512xf32> -> vector<128x512xf32>
    %c0_3 = arith.constant 0 : index
    %c0_4 = arith.constant 0 : index
    %3 = vector.load %arg3[%c0_3, %c0_4] : memref<1x512xbf16, #tpu.memory_space<vmem>>, vector<1x512xbf16>
    %4 = arith.extf %3 : vector<1x512xbf16> to vector<1x512xf32>
    %5 = vector.broadcast %4 : vector<1x512xf32> to vector<128x512xf32>
    %6 = arith.addf %2, %5 : vector<128x512xf32>
    %7 = arith.mulf %6, %6 : vector<128x512xf32>
    %cst_5 = arith.constant 1.59576917 : f32
    %8 = vector.broadcast %cst_5 : f32 to vector<128x512xf32>
    %9 = arith.mulf %8, %6 : vector<128x512xf32>
    %cst_6 = arith.constant 4.471500e-02 : f32
    %10 = vector.broadcast %cst_6 : f32 to vector<128x512xf32>
    %11 = arith.mulf %10, %7 : vector<128x512xf32>
    %cst_7 = arith.constant 1.000000e+00 : f32
    %12 = vector.broadcast %cst_7 : f32 to vector<128x512xf32>
    %13 = arith.addf %12, %11 : vector<128x512xf32>
    %14 = arith.mulf %9, %13 : vector<128x512xf32>
    %15 = arith.negf %14 : vector<128x512xf32>
    %16 = math.exp %15 : vector<128x512xf32>
    %cst_8 = arith.constant 1.000000e+00 : f32
    %17 = vector.broadcast %cst_8 : f32 to vector<128x512xf32>
    %18 = arith.addf %17, %16 : vector<128x512xf32>
    %19 = arith.divf %17, %18 : vector<128x512xf32>
    %20 = arith.mulf %6, %19 : vector<128x512xf32>
    %21 = arith.truncf %20 : vector<128x512xf32> to vector<128x512xbf16>
    %c0_9 = arith.constant 0 : index
    %c0_10 = arith.constant 0 : index
    %22 = vector.load %arg4[%c0_9, %c0_10] : memref<512x128xbf16, #tpu.memory_space<vmem>>, vector<512x128xbf16>
    %cst_11 = arith.constant dense<0.000000e+00> : vector<128x128xf32>
    %23 = tpu.matmul %21, %22, %cst_11 {dimension_numbers = #tpu.dot_dimension_numbers<[1], [0], [0], [1], [0, 0, 1, 1], [], []>} : vector<128x512xbf16>, vector<512x128xbf16>, vector<128x128xf32> -> vector<128x128xf32>
    %c0_12 = arith.constant 0 : index
    %c0_13 = arith.constant 0 : index
    %24 = vector.load %arg5[%c0_12, %c0_13] : memref<1x128xbf16, #tpu.memory_space<vmem>>, vector<1x128xbf16>
    %25 = arith.extf %24 : vector<1x128xbf16> to vector<1x128xf32>
    %26 = vector.broadcast %25 : vector<1x128xf32> to vector<128x128xf32>
    %27 = arith.addf %23, %26 : vector<128x128xf32>
    %28 = arith.truncf %27 : vector<128x128xf32> to vector<128x128xbf16>
    %c0_14 = arith.constant 0 : index
    %c0_15 = arith.constant 0 : index
    %29 = vector.load %arg6[%c0_14, %c0_15] : memref<128x128xbf16, #tpu.memory_space<vmem>>, vector<128x128xbf16>
    tpu.vector_store %arg6[%c0_14, %c0_15], %28 {strides = array<i32>} : memref<128x128xbf16, #tpu.memory_space<vmem>>, vector<128x128xbf16>,
    return
  }
  func.func @transform_0(%arg0: i32) -> (i32, i32) {
    %c0_i32 = arith.constant 0 : i32
    %c0_i32_0 = arith.constant 0 : i32
    return %arg0, %c0_i32 : i32, i32
  }
  func.func @transform_1(%arg0: i32) -> (i32, i32) {
    %c0_i32 = arith.constant 0 : i32
    %c0_i32_0 = arith.constant 0 : i32
    %c0_i32_1 = arith.constant 0 : i32
    return %c0_i32, %c0_i32_0 : i32, i32
  }
  func.func @transform_2(%arg0: i32) -> (i32, i32) {
    %c0_i32 = arith.constant 0 : i32
    %c0_i32_0 = arith.constant 0 : i32
    %c0_i32_1 = arith.constant 0 : i32
    return %c0_i32, %c0_i32_0 : i32, i32
  }
  func.func @transform_3(%arg0: i32) -> (i32, i32) {
    %c0_i32 = arith.constant 0 : i32
    %c0_i32_0 = arith.constant 0 : i32
    %c0_i32_1 = arith.constant 0 : i32
    return %c0_i32, %c0_i32_0 : i32, i32
  }
  func.func @transform_4(%arg0: i32) -> (i32, i32) {
    %c0_i32 = arith.constant 0 : i32
    %c0_i32_0 = arith.constant 0 : i32
    %c0_i32_1 = arith.constant 0 : i32
    return %c0_i32, %c0_i32_0 : i32, i32
  }
  func.func @transform_5(%arg0: i32) -> (i32, i32) {
    %c0_i32 = arith.constant 0 : i32
    %c0_i32_0 = arith.constant 0 : i32
    return %arg0, %c0_i32 : i32, i32
  }
}

</mosaic_0001>

<llo_original>
// kernel: tpu_custom_call.1
$region0: #{tpu_custom_call.1}
  #allocation0 [shape = 'u32[]', space=smem, size = 0x4, offset = 0x4, fixed_abs, tag = 'smem constant byte address 0x4 - core index']
  #allocation1 [shape = 'u32[144,128]{1,0:T(1,128)}', space=vmem, size = 0x12000, scoped, tag = 'internal scratch']
  %s0 = inlined_call_operand.hbm [shape: bf16[128,128], index: 0, kind: input, shape index: {}]
  %s1 = inlined_call_operand.hbm [shape: bf16[128,512], index: 1, kind: input, shape index: {}]
  %s2 = inlined_call_operand.hbm [shape: bf16[1,512], index: 2, kind: input, shape index: {}]
  %s3 = inlined_call_operand.hbm [shape: bf16[512,128], index: 3, kind: input, shape index: {}]
  %s4 = inlined_call_operand.hbm [shape: bf16[1,128], index: 4, kind: input, shape index: {}]
  %s5 = inlined_call_operand.hbm [shape: bf16[128,128], index: 5, kind: output, shape index: {}]
  %s6 = sld [smem:[#allocation0]]
  $region50: #{tpu_custom_call.1} parent=0
    _
  %s8 = ssub.s32 1, %s6
  %s9 = scalar_select 0, %s8, %s6
  $region1: #{tpu_custom_call.1} parent=0
    #allocation2 [shape = 'u8[32768]{0}', space=vmem, size = 0x8000, scoped, tag = 'input window, operand 0, single buffered']
    #allocation3 [shape = 's32[1]{0}', space=sflag, size = 0x4, scoped, tag = 'scoped memory for tpu_custom_call.1']
    #allocation4 [shape = 's32[1]{0}', space=sflag, size = 0x4, scoped, tag = 'scoped memory for tpu_custom_call.1']
    #allocation5 [shape = 'u8[131072]{0}', space=vmem, size = 0x20000, scoped, tag = 'input window, operand 1, single buffered']
    #allocation6 [shape = 's32[1]{0}', space=sflag, size = 0x4, scoped, tag = 'scoped memory for tpu_custom_call.1']
    #allocation7 [shape = 'u8[2048]{0}', space=vmem, size = 0x800, scoped, tag = 'input window, operand 2, single buffered']
    #allocation8 [shape = 'u8[131072]{0}', space=vmem, size = 0x20000, scoped, tag = 'input window, operand 3, single buffered']
    #allocation9 [shape = 's32[1]{0}', space=sflag, size = 0x4, scoped, tag = 'scoped memory for tpu_custom_call.1']
    #allocation10 [shape = 'u8[512]{0}', space=vmem, size = 0x400, scoped, tag = 'input window, operand 4, single buffered']
    #allocation11 [shape = 'u8[32768]{0}', space=vmem, size = 0x8000, scoped, tag = 'output window, operand 0, single buffered']
    %10 = vsyncpa [#allocation3], 0
    %11 = vsyncpa [#allocation6], 0
    %12 = vsyncpa [#allocation9], 0
    %13 = vsyncpa [#allocation4], 0
    // Predicated region
    $region2: #{tpu_custom_call.1} parent=1 // pred_check
      _
    $region3: #{tpu_custom_call.1} parent=1 // pred_check_branch
      %15 = sbr.rel (0) target = $region5
    $region4: #{tpu_custom_call.1} parent=1 // pred_region
      %s17 = ssub.s32 1024, 1024
      %18 = vsyncadd [#allocation3], %s17
      %s19 = sshll.u32 [#allocation2], 4
      %s20 = int_to_ptr.vmem [resolvable:$true] %s19
      %25 = dma.hbm_to_vmem [thread:$0]  %s0, 1024, %s20, [#allocation3], 64, 64, 4
    $region5: #{tpu_custom_call.1} parent=1 // pred_fallthru
      _
    // Predicated region
    $region6: #{tpu_custom_call.1} parent=1 // pred_check
      _
    $region7: #{tpu_custom_call.1} parent=1 // pred_check_branch
      %27 = sbr.rel (0) target = $region9
    $region8: #{tpu_custom_call.1} parent=1 // pred_region
      %s29 = ssub.s32 4096, 4096
      %30 = vsyncadd [#allocation6], %s29
      %s31 = sshll.u32 [#allocation5], 4
      %s32 = int_to_ptr.vmem [resolvable:$true] %s31
      %37 = dma.hbm_to_vmem [thread:$0]  %s1, 4096, %s32, [#allocation6], 256, 256, 16
    $region9: #{tpu_custom_call.1} parent=1 // pred_fallthru
      _
    // Predicated region
    $region10: #{tpu_custom_call.1} parent=1 // pred_check
      _
    $region11: #{tpu_custom_call.1} parent=1 // pred_check_branch
      %39 = sbr.rel (0) target = $region13
    $region12: #{tpu_custom_call.1} parent=1 // pred_region
      %s41 = ssub.s32 64, 64
      %42 = vsyncadd [#allocation6], %s41
      %s44 = sshll.u32 [#allocation7], 4
      %s45 = int_to_ptr.vmem [resolvable:$true] %s44
      %47 = dma.hbm_to_vmem [thread:$0]  %s2, 64, %s45, [#allocation6]
    $region13: #{tpu_custom_call.1} parent=1 // pred_fallthru
      _
    // Predicated region
    $region14: #{tpu_custom_call.1} parent=1 // pred_check
      _
    $region15: #{tpu_custom_call.1} parent=1 // pred_check_branch
      %49 = sbr.rel (0) target = $region17
    $region16: #{tpu_custom_call.1} parent=1 // pred_region
      %s51 = ssub.s32 4096, 4096
      %52 = vsyncadd [#allocation9], %s51
      %s53 = sshll.u32 [#allocation8], 4
      %s54 = int_to_ptr.vmem [resolvable:$true] %s53
      %59 = dma.hbm_to_vmem [thread:$0]  %s3, 4096, %s54, [#allocation9], 64, 64, 4
    $region17: #{tpu_custom_call.1} parent=1 // pred_fallthru
      _
    // Predicated region
    $region18: #{tpu_custom_call.1} parent=1 // pred_check
      _
    $region19: #{tpu_custom_call.1} parent=1 // pred_check_branch
      %61 = sbr.rel (0) target = $region21
    $region20: #{tpu_custom_call.1} parent=1 // pred_region
      %s63 = ssub.s32 16, 16
      %64 = vsyncadd [#allocation9], %s63
      %s66 = sshll.u32 [#allocation10], 4
      %s67 = int_to_ptr.vmem [resolvable:$true] %s66
      %69 = dma.hbm_to_vmem [thread:$0]  %s4, 16, %s67, [#allocation9]
    $region21: #{tpu_custom_call.1} parent=1 // pred_fallthru
      _
    // Predicated region
    $region22: #{tpu_custom_call.1} parent=1 // pred_check
      _
    $region23: #{tpu_custom_call.1} parent=1 // pred_check_branch
      %71 = sbr.rel (0) target = $region25
    $region24: #{tpu_custom_call.1} parent=1 // pred_region
      %72 = dma.done [#allocation3], 1024
    $region25: #{tpu_custom_call.1} parent=1 // pred_fallthru
      _
    // Predicated region
    $region26: #{tpu_custom_call.1} parent=1 // pred_check
      _
    $region27: #{tpu_custom_call.1} parent=1 // pred_check_branch
      %74 = sbr.rel (0) target = $region29
    $region28: #{tpu_custom_call.1} parent=1 // pred_region
      %75 = dma.done [#allocation6], 4096
    $region29: #{tpu_custom_call.1} parent=1 // pred_fallthru
      _
    // Predicated region
    $region30: #{tpu_custom_call.1} parent=1 // pred_check
      _
    $region31: #{tpu_custom_call.1} parent=1 // pred_check_branch
      %77 = sbr.rel (0) target = $region33
    $region32: #{tpu_custom_call.1} parent=1 // pred_region
      %78 = dma.done [#allocation6], 64
    $region33: #{tpu_custom_call.1} parent=1 // pred_fallthru
      _
    // Predicated region
    $region34: #{tpu_custom_call.1} parent=1 // pred_check
      _
    $region35: #{tpu_custom_call.1} parent=1 // pred_check_branch
      %80 = sbr.rel (0) target = $region37
    $region36: #{tpu_custom_call.1} parent=1 // pred_region
      %81 = dma.done [#allocation9], 4096
    $region37: #{tpu_custom_call.1} parent=1 // pred_fallthru
      _
    // Predicated region
    $region38: #{tpu_custom_call.1} parent=1 // pred_check
      _
    $region39: #{tpu_custom_call.1} parent=1 // pred_check_branch
      %83 = sbr.rel (0) target = $region41
    $region40: #{tpu_custom_call.1} parent=1 // pred_region
      %84 = dma.done [#allocation9], 16
    $region41: #{tpu_custom_call.1} parent=1 // pred_fallthru
      _
    %v86 = vld [vmem:[#allocation2] sm:$0xf]
    %v87 = vld [vmem:[#allocation2 + $0x4] sm:$0xf]
    %v88 = vld [vmem:[#allocation2 + $0x8] sm:$0xf]
    %v89 = vld [vmem:[#allocation2 + $0xc] sm:$0xf]
    %v90 = vld [vmem:[#allocation2 + $0x10] sm:$0xf]
    %v91 = vld [vmem:[#allocation2 + $0x14] sm:$0xf]
    %v92 = vld [vmem:[#allocation2 + $0x18] sm:$0xf]
    %v93 = vld [vmem:[#allocation2 + $0x1c] sm:$0xf]
    %v94 = vld [vmem:[#allocation2 + $0x20] sm:$0xf]
    %v95 = vld [vmem:[#allocation2 + $0x24] sm:$0xf]
    %v96 = vld [vmem:[#allocation2 + $0x28] sm:$0xf]
    %v97 = vld [vmem:[#allocation2 + $0x2c] sm:$0xf]
    %v98 = vld [vmem:[#allocation2 + $0x30] sm:$0xf]
    %v99 = vld [vmem:[#allocation2 + $0x34] sm:$0xf]
    %v100 = vld [vmem:[#allocation2 + $0x38] sm:$0xf]
    %v101 = vld [vmem:[#allocation2 + $0x3c] sm:$0xf]
    %v102 = vld [vmem:[#allocation5] sm:$0xff]
    %v103 = vld [vmem:[#allocation5 + $0x8] sm:$0xff]
    %v104 = vld [vmem:[#allocation5 + $0x10] sm:$0xff]
    %v105 = vld [vmem:[#allocation5 + $0x18] sm:$0xff]
    %v106 = vld [vmem:[#allocation5 + $0x20] sm:$0xff]
    %v107 = vld [vmem:[#allocation5 + $0x28] sm:$0xff]
    %v108 = vld [vmem:[#allocation5 + $0x30] sm:$0xff]
    %v109 = vld [vmem:[#allocation5 + $0x38] sm:$0xff]
    %v110 = vld [vmem:[#allocation5 + $0x40] sm:$0xff]
    %v111 = vld [vmem:[#allocation5 + $0x48] sm:$0xff]
    %v112 = vld [vmem:[#allocation5 + $0x50] sm:$0xff]
    %v113 = vld [vmem:[#allocation5 + $0x58] sm:$0xff]
    %v114 = vld [vmem:[#allocation5 + $0x60] sm:$0xff]
    %v115 = vld [vmem:[#allocation5 + $0x68] sm:$0xff]
    %v116 = vld [vmem:[#allocation5 + $0x70] sm:$0xff]
    %v117 = vld [vmem:[#allocation5 + $0x78] sm:$0xff]
    %v118 = vld [vmem:[#allocation5 + $0x80] sm:$0xff]
    %v119 = vld [vmem:[#allocation5 + $0x88] sm:$0xff]
    %v120 = vld [vmem:[#allocation5 + $0x90] sm:$0xff]
    %v121 = vld [vmem:[#allocation5 + $0x98] sm:$0xff]
    %v122 = vld [vmem:[#allocation5 + $0xa0] sm:$0xff]
    %v123 = vld [vmem:[#allocation5 + $0xa8] sm:$0xff]
    %v124 = vld [vmem:[#allocation5 + $0xb0] sm:$0xff]
    %v125 = vld [vmem:[#allocation5 + $0xb8] sm:$0xff]
    %v126 = vld [vmem:[#allocation5 + $0xc0] sm:$0xff]
    %v127 = vld [vmem:[#allocation5 + $0xc8] sm:$0xff]
    %v128 = vld [vmem:[#allocation5 + $0xd0] sm:$0xff]
    %v129 = vld [vmem:[#allocation5 + $0xd8] sm:$0xff]
    %v130 = vld [vmem:[#allocation5 + $0xe0] sm:$0xff]
    %v131 = vld [vmem:[#allocation5 + $0xe8] sm:$0xff]
    %v132 = vld [vmem:[#allocation5 + $0xf0] sm:$0xff]
    %v133 = vld [vmem:[#allocation5 + $0xf8] sm:$0xff]
    %v134 = vld [vmem:[#allocation7] sm:$0xf]
    %v135 = vunpack.c.l.bf16 %v134
    %v137 = vlaneseq
    %v138 = vshrl.u32 %v137, 7
    %v139 = vsub.s32 0, %v138
    %v140 = vrot.slane %v135, %v139
    %v141 = vlaneseq
    %v142 = vshrl.u32 %v141, 7
    %v143 = vsub.s32 2, %v142
    %v144 = vrot.slane %v135, %v143
    %v145 = vlaneseq
    %v146 = vshrl.u32 %v145, 7
    %v147 = vsub.s32 4, %v146
    %v148 = vrot.slane %v135, %v147
    %v149 = vlaneseq
    %v150 = vshrl.u32 %v149, 7
    %v151 = vsub.s32 6, %v150
    %v152 = vrot.slane %v135, %v151
    %v157 = vlaneseq
    %v158 = vshrl.u32 %v157, 7
    %v159 = vsub.s32 0, %v158
    %v160 = vrot.slane %v140, %v159
    %v161 = vlaneseq
    %v162 = vshrl.u32 %v161, 7
    %v163 = vsub.s32 0, %v162
    %v164 = vrot.slane %v144, %v163
    %v165 = vlaneseq
    %v166 = vshrl.u32 %v165, 7
    %v167 = vsub.s32 0, %v166
    %v168 = vrot.slane %v148, %v167
    %v169 = vlaneseq
    %v170 = vshrl.u32 %v169, 7
    %v171 = vsub.s32 0, %v170
    %v172 = vrot.slane %v152, %v171
    %v189 = vunpack.c.l.b16 %v86
    %v190 = vunpack.c.l.b16 %v87
    %v191 = vunpack.c.l.b16 %v88
    %v192 = vunpack.c.l.b16 %v89
    %v193 = vunpack.c.l.b16 %v90
    %v194 = vunpack.c.l.b16 %v91
    %v195 = vunpack.c.l.b16 %v92
    %v196 = vunpack.c.l.b16 %v93
    %v197 = vunpack.c.l.b16 %v94
    %v198 = vunpack.c.l.b16 %v95
    %v199 = vunpack.c.l.b16 %v96
    %v200 = vunpack.c.l.b16 %v97
    %v201 = vunpack.c.l.b16 %v98
    %v202 = vunpack.c.l.b16 %v99
    %v203 = vunpack.c.l.b16 %v100
    %v204 = vunpack.c.l.b16 %v101
    %v205 = vpack.c.b16 %v190, %v189
    %v206 = vpack.c.b16 %v192, %v191
    %v207 = vpack.c.b16 %v194, %v193
    %v208 = vpack.c.b16 %v196, %v195
    %v209 = vpack.c.b16 %v198, %v197
    %v210 = vpack.c.b16 %v200, %v199
    %v211 = vpack.c.b16 %v202, %v201
    %v212 = vpack.c.b16 %v204, %v203
    %v253 = vunpack.c.l.b16 %v102
    %v254 = vunpack.c.h.b16 %v102
    %v255 = vunpack.c.l.b16 %v103
    %v256 = vunpack.c.h.b16 %v103
    %v257 = vunpack.c.l.b16 %v104
    %v258 = vunpack.c.h.b16 %v104
    %v259 = vunpack.c.l.b16 %v105
    %v260 = vunpack.c.h.b16 %v105
    %v261 = vunpack.c.l.b16 %v106
    %v262 = vunpack.c.h.b16 %v106
    %v263 = vunpack.c.l.b16 %v107
    %v264 = vunpack.c.h.b16 %v107
    %v265 = vunpack.c.l.b16 %v108
    %v266 = vunpack.c.h.b16 %v108
    %v267 = vunpack.c.l.b16 %v109
    %v268 = vunpack.c.h.b16 %v109
    %v269 = vunpack.c.l.b16 %v110
    %v270 = vunpack.c.h.b16 %v110
    %v271 = vunpack.c.l.b16 %v111
    %v272 = vunpack.c.h.b16 %v111
    %v273 = vunpack.c.l.b16 %v112
    %v274 = vunpack.c.h.b16 %v112
    %v275 = vunpack.c.l.b16 %v113
    %v276 = vunpack.c.h.b16 %v113
    %v277 = vunpack.c.l.b16 %v114
    %v278 = vunpack.c.h.b16 %v114
    %v279 = vunpack.c.l.b16 %v115
    %v280 = vunpack.c.h.b16 %v115
    %v281 = vunpack.c.l.b16 %v116
    %v282 = vunpack.c.h.b16 %v116
    %v283 = vunpack.c.l.b16 %v117
    %v284 = vunpack.c.h.b16 %v117
    %v285 = vunpack.c.l.b16 %v118
    %v286 = vunpack.c.h.b16 %v118
    %v287 = vunpack.c.l.b16 %v119
    %v288 = vunpack.c.h.b16 %v119
    %v289 = vunpack.c.l.b16 %v120
    %v290 = vunpack.c.h.b16 %v120
    %v291 = vunpack.c.l.b16 %v121
    %v292 = vunpack.c.h.b16 %v121
    %v293 = vunpack.c.l.b16 %v122
    %v294 = vunpack.c.h.b16 %v122
    %v295 = vunpack.c.l.b16 %v123
    %v296 = vunpack.c.h.b16 %v123
    %v297 = vunpack.c.l.b16 %v124
    %v298 = vunpack.c.h.b16 %v124
    %v299 = vunpack.c.l.b16 %v125
    %v300 = vunpack.c.h.b16 %v125
    %v301 = vunpack.c.l.b16 %v126
    %v302 = vunpack.c.h.b16 %v126
    %v303 = vunpack.c.l.b16 %v127
    %v304 = vunpack.c.h.b16 %v127
    %v305 = vunpack.c.l.b16 %v128
    %v306 = vunpack.c.h.b16 %v128
    %v307 = vunpack.c.l.b16 %v129
    %v308 = vunpack.c.h.b16 %v129
    %v309 = vunpack.c.l.b16 %v130
    %v310 = vunpack.c.h.b16 %v130
    %v311 = vunpack.c.l.b16 %v131
    %v312 = vunpack.c.h.b16 %v131
    %v313 = vunpack.c.l.b16 %v132
    %v314 = vunpack.c.h.b16 %v132
    %v315 = vunpack.c.l.b16 %v133
    %v316 = vunpack.c.h.b16 %v133
    %v317 = vpack.c.b16 %v257, %v253
    %v318 = vpack.c.b16 %v258, %v254
    %v319 = vpack.c.b16 %v259, %v255
    %v320 = vpack.c.b16 %v260, %v256
    %v321 = vpack.c.b16 %v265, %v261
    %v322 = vpack.c.b16 %v266, %v262
    %v323 = vpack.c.b16 %v267, %v263
    %v324 = vpack.c.b16 %v268, %v264
    %v325 = vpack.c.b16 %v273, %v269
    %v326 = vpack.c.b16 %v274, %v270
    %v327 = vpack.c.b16 %v275, %v271
    %v328 = vpack.c.b16 %v276, %v272
    %v329 = vpack.c.b16 %v281, %v277
    %v330 = vpack.c.b16 %v282, %v278
    %v331 = vpack.c.b16 %v283, %v279
    %v332 = vpack.c.b16 %v284, %v280
    %v333 = vpack.c.b16 %v289, %v285
    %v334 = vpack.c.b16 %v290, %v286
    %v335 = vpack.c.b16 %v291, %v287
    %v336 = vpack.c.b16 %v292, %v288
    %v337 = vpack.c.b16 %v297, %v293
    %v338 = vpack.c.b16 %v298, %v294
    %v339 = vpack.c.b16 %v299, %v295
    %v340 = vpack.c.b16 %v300, %v296
    %v341 = vpack.c.b16 %v305, %v301
    %v342 = vpack.c.b16 %v306, %v302
    %v343 = vpack.c.b16 %v307, %v303
    %v344 = vpack.c.b16 %v308, %v304
    %v345 = vpack.c.b16 %v313, %v309
    %v346 = vpack.c.b16 %v314, %v310
    %v347 = vpack.c.b16 %v315, %v311
    %v348 = vpack.c.b16 %v316, %v312
    %381 = vmatprep.subr.bf16.mxu0 %v318
    %382 = vmatpush1.bf16.msra.mxu0 %v317
    %383 = vmatprep.subr.bf16.mxu0 %v322
    %384 = vmatpush1.bf16.msra.mxu0 %v321
    %385 = vmatprep.subr.bf16.mxu0 %v326
    %386 = vmatpush1.bf16.msra.mxu0 %v325
    %387 = vmatprep.subr.bf16.mxu0 %v330
    %388 = vmatpush1.bf16.msra.mxu0 %v329
    %389 = vmatprep.subr.bf16.mxu0 %v334
    %390 = vmatpush1.bf16.msra.mxu0 %v333
    %391 = vmatprep.subr.bf16.mxu0 %v338
    %392 = vmatpush1.bf16.msra.mxu0 %v337
    %393 = vmatprep.subr.bf16.mxu0 %v342
    %394 = vmatpush1.bf16.msra.mxu0 %v341
    %395 = vmatprep.subr.bf16.mxu0 %v346
    %396 = vmatpush1.bf16.msra.mxu0 %v345
    %397 = vmatprep.subr.bf16.mxu0 0
    %398 = vmatpush1.bf16.msra.mxu0 0
    %399 = vmatprep.subr.bf16.mxu0 0
    %400 = vmatpush1.bf16.msra.mxu0 0
    %401 = vmatprep.subr.bf16.mxu0 0
    %402 = vmatpush1.bf16.msra.mxu0 0
    %403 = vmatprep.subr.bf16.mxu0 0
    %404 = vmatpush1.bf16.msra.mxu0 0
    %405 = vmatprep.subr.bf16.mxu0 0
    %406 = vmatpush1.bf16.msra.mxu0 0
    %407 = vmatprep.subr.bf16.mxu0 0
    %408 = vmatpush1.bf16.msra.mxu0 0
    %409 = vmatprep.subr.bf16.mxu0 0
    %410 = vmatpush1.bf16.msra.mxu0 0
    %411 = vmatprep.subr.bf16.mxu0 0
    %412 = vmatpush1.bf16.msra.mxu0 0
    %413 = vmatprep.mubr.bf16.mxu0 0
    %414 = vmatmul.mubr.bf16.gmra.mrb[0].mxu0 %v205
    %v415 = vpop.f32.mrb[0].mxu0
    %v416 = vadd.f32 %v160, %v415
    %v417 = vpop.f32.mrb[0].mxu0
    %v418 = vadd.f32 %v164, %v417
    %v419 = vpop.f32.mrb[0].mxu0
    %v420 = vadd.f32 %v160, %v419
    %v421 = vpop.f32.mrb[0].mxu0
    %v422 = vadd.f32 %v164, %v421
    %423 = vmatprep.mubr.bf16.mxu0 0
    %424 = vmatmul.mubr.bf16.gmra.mrb[0].mxu0 %v206
    %v425 = vpop.f32.mrb[0].mxu0
    %v426 = vadd.f32 %v160, %v425
    %v427 = vpop.f32.mrb[0].mxu0
    %v428 = vadd.f32 %v164, %v427
    %v429 = vpop.f32.mrb[0].mxu0
    %v430 = vadd.f32 %v160, %v429
    %v431 = vpop.f32.mrb[0].mxu0
    %v432 = vadd.f32 %v164, %v431
    %433 = vmatprep.mubr.bf16.mxu0 0
    %434 = vmatmul.mubr.bf16.gmra.mrb[0].mxu0 %v207
    %v435 = vpop.f32.mrb[0].mxu0
    %v436 = vadd.f32 %v160, %v435
    %v437 = vpop.f32.mrb[0].mxu0
    %v438 = vadd.f32 %v164, %v437
    %v439 = vpop.f32.mrb[0].mxu0
    %v440 = vadd.f32 %v160, %v439
    %v441 = vpop.f32.mrb[0].mxu0
    %v442 = vadd.f32 %v164, %v441
    %443 = vmatprep.mubr.bf16.mxu0 0
    %444 = vmatmul.mubr.bf16.gmra.mrb[0].mxu0 %v208
    %v445 = vpop.f32.mrb[0].mxu0
    %v446 = vadd.f32 %v160, %v445
    %v447 = vpop.f32.mrb[0].mxu0
    %v448 = vadd.f32 %v164, %v447
    %v449 = vpop.f32.mrb[0].mxu0
    %v450 = vadd.f32 %v160, %v449
    %v451 = vpop.f32.mrb[0].mxu0
    %v452 = vadd.f32 %v164, %v451
    %453 = vmatprep.mubr.bf16.mxu0 0
    %454 = vmatmul.mubr.bf16.gmra.mrb[0].mxu0 %v209
    %v455 = vpop.f32.mrb[0].mxu0
    %v456 = vadd.f32 %v160, %v455
    %v457 = vpop.f32.mrb[0].mxu0
    %v458 = vadd.f32 %v164, %v457
    %v459 = vpop.f32.mrb[0].mxu0
    %v460 = vadd.f32 %v160, %v459
    %v461 = vpop.f32.mrb[0].mxu0
    %v462 = vadd.f32 %v164, %v461
    %463 = vmatprep.mubr.bf16.mxu0 0
    %464 = vmatmul.mubr.bf16.gmra.mrb[0].mxu0 %v210
    %v465 = vpop.f32.mrb[0].mxu0
    %v466 = vadd.f32 %v160, %v465
    %v467 = vpop.f32.mrb[0].mxu0
    %v468 = vadd.f32 %v164, %v467
    %v469 = vpop.f32.mrb[0].mxu0
    %v470 = vadd.f32 %v160, %v469
    %v471 = vpop.f32.mrb[0].mxu0
    %v472 = vadd.f32 %v164, %v471
    %473 = vmatprep.mubr.bf16.mxu0 0
    %474 = vmatmul.mubr.bf16.gmra.mrb[0].mxu0 %v211
    %v475 = vpop.f32.mrb[0].mxu0
    %v476 = vadd.f32 %v160, %v475
    %v477 = vpop.f32.mrb[0].mxu0
    %v478 = vadd.f32 %v164, %v477
    %v479 = vpop.f32.mrb[0].mxu0
    %v480 = vadd.f32 %v160, %v479
    %v481 = vpop.f32.mrb[0].mxu0
    %v482 = vadd.f32 %v164, %v481
    %483 = vmatprep.mubr.bf16.mxu0 0
    %484 = vmatmul.mubr.bf16.gmra.mrb[0].mxu0 %v212
    %v485 = vpop.f32.mrb[0].mxu0
    %v486 = vadd.f32 %v160, %v485
    %v487 = vpop.f32.mrb[0].mxu0
    %v488 = vadd.f32 %v164, %v487
    %v489 = vpop.f32.mrb[0].mxu0
    %v490 = vadd.f32 %v160, %v489
    %v491 = vpop.f32.mrb[0].mxu0
    %v492 = vadd.f32 %v164, %v491
    %493 = vdwg.mxu0
    %494 = vmatprep.subr.bf16.mxu0 %v320
    %495 = vmatpush1.bf16.msra.mxu0 %v319
    %496 = vmatprep.subr.bf16.mxu0 %v324
    %497 = vmatpush1.bf16.msra.mxu0 %v323
    %498 = vmatprep.subr.bf16.mxu0 %v328
    %499 = vmatpush1.bf16.msra.mxu0 %v327
    %500 = vmatprep.subr.bf16.mxu0 %v332
    %501 = vmatpush1.bf16.msra.mxu0 %v331
    %502 = vmatprep.subr.bf16.mxu0 %v336
    %503 = vmatpush1.bf16.msra.mxu0 %v335
    %504 = vmatprep.subr.bf16.mxu0 %v340
    %505 = vmatpush1.bf16.msra.mxu0 %v339
    %506 = vmatprep.subr.bf16.mxu0 %v344
    %507 = vmatpush1.bf16.msra.mxu0 %v343
    %508 = vmatprep.subr.bf16.mxu0 %v348
    %509 = vmatpush1.bf16.msra.mxu0 %v347
    %510 = vmatprep.subr.bf16.mxu0 0
    %511 = vmatpush1.bf16.msra.mxu0 0
    %512 = vmatprep.subr.bf16.mxu0 0
    %513 = vmatpush1.bf16.msra.mxu0 0
    %514 = vmatprep.subr.bf16.mxu0 0
    %515 = vmatpush1.bf16.msra.mxu0 0
    %516 = vmatprep.subr.bf16.mxu0 0
    %517 = vmatpush1.bf16.msra.mxu0 0
    %518 = vmatprep.subr.bf16.mxu0 0
    %519 = vmatpush1.bf16.msra.mxu0 0
    %520 = vmatprep.subr.bf16.mxu0 0
    %521 = vmatpush1.bf16.msra.mxu0 0
    %522 = vmatprep.subr.bf16.mxu0 0
    %523 = vmatpush1.bf16.msra.mxu0 0
    %524 = vmatprep.subr.bf16.mxu0 0
    %525 = vmatpush1.bf16.msra.mxu0 0
    %526 = vmatprep.mubr.bf16.mxu0 0
    %527 = vmatmul.mubr.bf16.gmra.mrb[0].mxu0 %v205
    %v528 = vpop.f32.mrb[0].mxu0
    %v529 = vadd.f32 %v168, %v528
    %v530 = vpop.f32.mrb[0].mxu0
    %v531 = vadd.f32 %v172, %v530
    %v532 = vpop.f32.mrb[0].mxu0
    %v533 = vadd.f32 %v168, %v532
    %v534 = vpop.f32.mrb[0].mxu0
    %v535 = vadd.f32 %v172, %v534
    %536 = vmatprep.mubr.bf16.mxu0 0
    %537 = vmatmul.mubr.bf16.gmra.mrb[0].mxu0 %v206
    %v538 = vpop.f32.mrb[0].mxu0
    %v539 = vadd.f32 %v168, %v538
    %v540 = vpop.f32.mrb[0].mxu0
    %v541 = vadd.f32 %v172, %v540
    %v542 = vpop.f32.mrb[0].mxu0
    %v543 = vadd.f32 %v168, %v542
    %v544 = vpop.f32.mrb[0].mxu0
    %v545 = vadd.f32 %v172, %v544
    %546 = vmatprep.mubr.bf16.mxu0 0
    %547 = vmatmul.mubr.bf16.gmra.mrb[0].mxu0 %v207
    %v548 = vpop.f32.mrb[0].mxu0
    %v549 = vadd.f32 %v168, %v548
    %v550 = vpop.f32.mrb[0].mxu0
    %v551 = vadd.f32 %v172, %v550
    %v552 = vpop.f32.mrb[0].mxu0
    %v553 = vadd.f32 %v168, %v552
    %v554 = vpop.f32.mrb[0].mxu0
    %v555 = vadd.f32 %v172, %v554
    %556 = vmatprep.mubr.bf16.mxu0 0
    %557 = vmatmul.mubr.bf16.gmra.mrb[0].mxu0 %v208
    %v558 = vpop.f32.mrb[0].mxu0
    %v559 = vadd.f32 %v168, %v558
    %v560 = vpop.f32.mrb[0].mxu0
    %v561 = vadd.f32 %v172, %v560
    %v562 = vpop.f32.mrb[0].mxu0
    %v563 = vadd.f32 %v168, %v562
    %v564 = vpop.f32.mrb[0].mxu0
    %v565 = vadd.f32 %v172, %v564
    %566 = vmatprep.mubr.bf16.mxu0 0
    %567 = vmatmul.mubr.bf16.gmra.mrb[0].mxu0 %v209
    %v568 = vpop.f32.mrb[0].mxu0
    %v569 = vadd.f32 %v168, %v568
    %v570 = vpop.f32.mrb[0].mxu0
    %v571 = vadd.f32 %v172, %v570
    %v572 = vpop.f32.mrb[0].mxu0
    %v573 = vadd.f32 %v168, %v572
    %v574 = vpop.f32.mrb[0].mxu0
    %v575 = vadd.f32 %v172, %v574
    %576 = vmatprep.mubr.bf16.mxu0 0
    %577 = vmatmul.mubr.bf16.gmra.mrb[0].mxu0 %v210
    %v578 = vpop.f32.mrb[0].mxu0
    %v579 = vadd.f32 %v168, %v578
    %v580 = vpop.f32.mrb[0].mxu0
    %v581 = vadd.f32 %v172, %v580
    %v582 = vpop.f32.mrb[0].mxu0
    %v583 = vadd.f32 %v168, %v582
    %v584 = vpop.f32.mrb[0].mxu0
    %v585 = vadd.f32 %v172, %v584
    %586 = vmatprep.mubr.bf16.mxu0 0
    %587 = vmatmul.mubr.bf16.gmra.mrb[0].mxu0 %v211
    %v588 = vpop.f32.mrb[0].mxu0
    %v589 = vadd.f32 %v168, %v588
    %v590 = vpop.f32.mrb[0].mxu0
    %v591 = vadd.f32 %v172, %v590
    %v592 = vpop.f32.mrb[0].mxu0
    %v593 = vadd.f32 %v168, %v592
    %v594 = vpop.f32.mrb[0].mxu0
    %v595 = vadd.f32 %v172, %v594
    %596 = vmatprep.mubr.bf16.mxu0 0
    %597 = vmatmul.mubr.bf16.gmra.mrb[0].mxu0 %v212
    %v598 = vpop.f32.mrb[0].mxu0
    %v599 = vadd.f32 %v168, %v598
    %v600 = vpop.f32.mrb[0].mxu0
    %v601 = vadd.f32 %v172, %v600
    %v602 = vpop.f32.mrb[0].mxu0
    %v603 = vadd.f32 %v168, %v602
    %v604 = vpop.f32.mrb[0].mxu0
    %v605 = vadd.f32 %v172, %v604
    %606 = vdwg.mxu0
    %v607 = vmul.f32 %v416, %v416
    %v608 = vmul.f32 %v418, %v418
    %v609 = vmul.f32 %v529, %v529
    %v610 = vmul.f32 %v531, %v531
    %v611 = vmul.f32 %v420, %v420
    %v612 = vmul.f32 %v422, %v422
    %v613 = vmul.f32 %v533, %v533
    %v614 = vmul.f32 %v535, %v535
    %v615 = vmul.f32 %v426, %v426
    %v616 = vmul.f32 %v428, %v428
    %v617 = vmul.f32 %v539, %v539
    %v618 = vmul.f32 %v541, %v541
    %v619 = vmul.f32 %v430, %v430
    %v620 = vmul.f32 %v432, %v432
    %v621 = vmul.f32 %v543, %v543
    %v622 = vmul.f32 %v545, %v545
    %v623 = vmul.f32 %v436, %v436
    %v624 = vmul.f32 %v438, %v438
    %v625 = vmul.f32 %v549, %v549
    %v626 = vmul.f32 %v551, %v551
    %v627 = vmul.f32 %v440, %v440
    %v628 = vmul.f32 %v442, %v442
    %v629 = vmul.f32 %v553, %v553
    %v630 = vmul.f32 %v555, %v555
    %v631 = vmul.f32 %v446, %v446
    %v632 = vmul.f32 %v448, %v448
    %v633 = vmul.f32 %v559, %v559
    %v634 = vmul.f32 %v561, %v561
    %v635 = vmul.f32 %v450, %v450
    %v636 = vmul.f32 %v452, %v452
    %v637 = vmul.f32 %v563, %v563
    %v638 = vmul.f32 %v565, %v565
    %v639 = vmul.f32 %v456, %v456
    %v640 = vmul.f32 %v458, %v458
    %v641 = vmul.f32 %v569, %v569
    %v642 = vmul.f32 %v571, %v571
    %v643 = vmul.f32 %v460, %v460
    %v644 = vmul.f32 %v462, %v462
    %v645 = vmul.f32 %v573, %v573
    %v646 = vmul.f32 %v575, %v575
    %v647 = vmul.f32 %v466, %v466
    %v648 = vmul.f32 %v468, %v468
    %v649 = vmul.f32 %v579, %v579
    %v650 = vmul.f32 %v581, %v581
    %v651 = vmul.f32 %v470, %v470
    %v652 = vmul.f32 %v472, %v472
    %v653 = vmul.f32 %v583, %v583
    %v654 = vmul.f32 %v585, %v585
    %v655 = vmul.f32 %v476, %v476
    %v656 = vmul.f32 %v478, %v478
    %v657 = vmul.f32 %v589, %v589
    %v658 = vmul.f32 %v591, %v591
    %v659 = vmul.f32 %v480, %v480
    %v660 = vmul.f32 %v482, %v482
    %v661 = vmul.f32 %v593, %v593
    %v662 = vmul.f32 %v595, %v595
    %v663 = vmul.f32 %v486, %v486
    %v664 = vmul.f32 %v488, %v488
    %v665 = vmul.f32 %v599, %v599
    %v666 = vmul.f32 %v601, %v601
    %v667 = vmul.f32 %v490, %v490
    %v668 = vmul.f32 %v492, %v492
    %v669 = vmul.f32 %v603, %v603
    %v670 = vmul.f32 %v605, %v605
    %v671 = vmul.f32 %v416, 1.5957692
    %v672 = vmul.f32 %v418, 1.5957692
    %v673 = vmul.f32 %v529, 1.5957692
    %v674 = vmul.f32 %v531, 1.5957692
    %v675 = vmul.f32 %v420, 1.5957692
    %v676 = vmul.f32 %v422, 1.5957692
    %v677 = vmul.f32 %v533, 1.5957692
    %v678 = vmul.f32 %v535, 1.5957692
    %v679 = vmul.f32 %v426, 1.5957692
    %v680 = vmul.f32 %v428, 1.5957692
    %v681 = vmul.f32 %v539, 1.5957692
    %v682 = vmul.f32 %v541, 1.5957692
    %v683 = vmul.f32 %v430, 1.5957692
    %v684 = vmul.f32 %v432, 1.5957692
    %v685 = vmul.f32 %v543, 1.5957692
    %v686 = vmul.f32 %v545, 1.5957692
    %v687 = vmul.f32 %v436, 1.5957692
    %v688 = vmul.f32 %v438, 1.5957692
    %v689 = vmul.f32 %v549, 1.5957692
    %v690 = vmul.f32 %v551, 1.5957692
    %v691 = vmul.f32 %v440, 1.5957692
    %v692 = vmul.f32 %v442, 1.5957692
    %v693 = vmul.f32 %v553, 1.5957692
    %v694 = vmul.f32 %v555, 1.5957692
    %v695 = vmul.f32 %v446, 1.5957692
    %v696 = vmul.f32 %v448, 1.5957692
    %v697 = vmul.f32 %v559, 1.5957692
    %v698 = vmul.f32 %v561, 1.5957692
    %v699 = vmul.f32 %v450, 1.5957692
    %v700 = vmul.f32 %v452, 1.5957692
    %v701 = vmul.f32 %v563, 1.5957692
    %v702 = vmul.f32 %v565, 1.5957692
    %v703 = vmul.f32 %v456, 1.5957692
    %v704 = vmul.f32 %v458, 1.5957692
    %v705 = vmul.f32 %v569, 1.5957692
    %v706 = vmul.f32 %v571, 1.5957692
    %v707 = vmul.f32 %v460, 1.5957692
    %v708 = vmul.f32 %v462, 1.5957692
    %v709 = vmul.f32 %v573, 1.5957692
    %v710 = vmul.f32 %v575, 1.5957692
    %v711 = vmul.f32 %v466, 1.5957692
    %v712 = vmul.f32 %v468, 1.5957692
    %v713 = vmul.f32 %v579, 1.5957692
    %v714 = vmul.f32 %v581, 1.5957692
    %v715 = vmul.f32 %v470, 1.5957692
    %v716 = vmul.f32 %v472, 1.5957692
    %v717 = vmul.f32 %v583, 1.5957692
    %v718 = vmul.f32 %v585, 1.5957692
    %v719 = vmul.f32 %v476, 1.5957692
    %v720 = vmul.f32 %v478, 1.5957692
    %v721 = vmul.f32 %v589, 1.5957692
    %v722 = vmul.f32 %v591, 1.5957692
    %v723 = vmul.f32 %v480, 1.5957692
    %v724 = vmul.f32 %v482, 1.5957692
    %v725 = vmul.f32 %v593, 1.5957692
    %v726 = vmul.f32 %v595, 1.5957692
    %v727 = vmul.f32 %v486, 1.5957692
    %v728 = vmul.f32 %v488, 1.5957692
    %v729 = vmul.f32 %v599, 1.5957692
    %v730 = vmul.f32 %v601, 1.5957692
    %v731 = vmul.f32 %v490, 1.5957692
    %v732 = vmul.f32 %v492, 1.5957692
    %v733 = vmul.f32 %v603, 1.5957692
    %v734 = vmul.f32 %v605, 1.5957692
    %v735 = vmul.f32 %v607, 0.044715
    %v736 = vmul.f32 %v608, 0.044715
    %v737 = vmul.f32 %v609, 0.044715
    %v738 = vmul.f32 %v610, 0.044715
    %v739 = vmul.f32 %v611, 0.044715
    %v740 = vmul.f32 %v612, 0.044715
    %v741 = vmul.f32 %v613, 0.044715
    %v742 = vmul.f32 %v614, 0.044715
    %v743 = vmul.f32 %v615, 0.044715
    %v744 = vmul.f32 %v616, 0.044715
    %v745 = vmul.f32 %v617, 0.044715
    %v746 = vmul.f32 %v618, 0.044715
    %v747 = vmul.f32 %v619, 0.044715
    %v748 = vmul.f32 %v620, 0.044715
    %v749 = vmul.f32 %v621, 0.044715
    %v750 = vmul.f32 %v622, 0.044715
    %v751 = vmul.f32 %v623, 0.044715
    %v752 = vmul.f32 %v624, 0.044715
    %v753 = vmul.f32 %v625, 0.044715
    %v754 = vmul.f32 %v626, 0.044715
    %v755 = vmul.f32 %v627, 0.044715
    %v756 = vmul.f32 %v628, 0.044715
    %v757 = vmul.f32 %v629, 0.044715
    %v758 = vmul.f32 %v630, 0.044715
    %v759 = vmul.f32 %v631, 0.044715
    %v760 = vmul.f32 %v632, 0.044715
    %v761 = vmul.f32 %v633, 0.044715
    %v762 = vmul.f32 %v634, 0.044715
    %v763 = vmul.f32 %v635, 0.044715
    %v764 = vmul.f32 %v636, 0.044715
    %v765 = vmul.f32 %v637, 0.044715
    %v766 = vmul.f32 %v638, 0.044715
    %v767 = vmul.f32 %v639, 0.044715
    %v768 = vmul.f32 %v640, 0.044715
    %v769 = vmul.f32 %v641, 0.044715
    %v770 = vmul.f32 %v642, 0.044715
    %v771 = vmul.f32 %v643, 0.044715
    %v772 = vmul.f32 %v644, 0.044715
    %v773 = vmul.f32 %v645, 0.044715
    %v774 = vmul.f32 %v646, 0.044715
    %v775 = vmul.f32 %v647, 0.044715
    %v776 = vmul.f32 %v648, 0.044715
    %v777 = vmul.f32 %v649, 0.044715
    %v778 = vmul.f32 %v650, 0.044715
    %v779 = vmul.f32 %v651, 0.044715
    %v780 = vmul.f32 %v652, 0.044715
    %v781 = vmul.f32 %v653, 0.044715
    %v782 = vmul.f32 %v654, 0.044715
    %v783 = vmul.f32 %v655, 0.044715
    %v784 = vmul.f32 %v656, 0.044715
    %v785 = vmul.f32 %v657, 0.044715
    %v786 = vmul.f32 %v658, 0.044715
    %v787 = vmul.f32 %v659, 0.044715
    %v788 = vmul.f32 %v660, 0.044715
    %v789 = vmul.f32 %v661, 0.044715
    %v790 = vmul.f32 %v662, 0.044715
    %v791 = vmul.f32 %v663, 0.044715
    %v792 = vmul.f32 %v664, 0.044715
    %v793 = vmul.f32 %v665, 0.044715
    %v794 = vmul.f32 %v666, 0.044715
    %v795 = vmul.f32 %v667, 0.044715
    %v796 = vmul.f32 %v668, 0.044715
    %v797 = vmul.f32 %v669, 0.044715
    %v798 = vmul.f32 %v670, 0.044715
    %v799 = vadd.f32 %v735, 1.0
    %v800 = vadd.f32 %v736, 1.0
    %v801 = vadd.f32 %v737, 1.0
    %v802 = vadd.f32 %v738, 1.0
    %v803 = vadd.f32 %v739, 1.0
    %v804 = vadd.f32 %v740, 1.0
    %v805 = vadd.f32 %v741, 1.0
    %v806 = vadd.f32 %v742, 1.0
    %v807 = vadd.f32 %v743, 1.0
    %v808 = vadd.f32 %v744, 1.0
    %v809 = vadd.f32 %v745, 1.0
    %v810 = vadd.f32 %v746, 1.0
    %v811 = vadd.f32 %v747, 1.0
    %v812 = vadd.f32 %v748, 1.0
    %v813 = vadd.f32 %v749, 1.0
    %v814 = vadd.f32 %v750, 1.0
    %v815 = vadd.f32 %v751, 1.0
    %v816 = vadd.f32 %v752, 1.0
    %v817 = vadd.f32 %v753, 1.0
    %v818 = vadd.f32 %v754, 1.0
    %v819 = vadd.f32 %v755, 1.0
    %v820 = vadd.f32 %v756, 1.0
    %v821 = vadd.f32 %v757, 1.0
    %v822 = vadd.f32 %v758, 1.0
    %v823 = vadd.f32 %v759, 1.0
    %v824 = vadd.f32 %v760, 1.0
    %v825 = vadd.f32 %v761, 1.0
    %v826 = vadd.f32 %v762, 1.0
    %v827 = vadd.f32 %v763, 1.0
    %v828 = vadd.f32 %v764, 1.0
    %v829 = vadd.f32 %v765, 1.0
    %v830 = vadd.f32 %v766, 1.0
    %v831 = vadd.f32 %v767, 1.0
    %v832 = vadd.f32 %v768, 1.0
    %v833 = vadd.f32 %v769, 1.0
    %v834 = vadd.f32 %v770, 1.0
    %v835 = vadd.f32 %v771, 1.0
    %v836 = vadd.f32 %v772, 1.0
    %v837 = vadd.f32 %v773, 1.0
    %v838 = vadd.f32 %v774, 1.0
    %v839 = vadd.f32 %v775, 1.0
    %v840 = vadd.f32 %v776, 1.0
    %v841 = vadd.f32 %v777, 1.0
    %v842 = vadd.f32 %v778, 1.0
    %v843 = vadd.f32 %v779, 1.0
    %v844 = vadd.f32 %v780, 1.0
    %v845 = vadd.f32 %v781, 1.0
    %v846 = vadd.f32 %v782, 1.0
    %v847 = vadd.f32 %v783, 1.0
    %v848 = vadd.f32 %v784, 1.0
    %v849 = vadd.f32 %v785, 1.0
    %v850 = vadd.f32 %v786, 1.0
    %v851 = vadd.f32 %v787, 1.0
    %v852 = vadd.f32 %v788, 1.0
    %v853 = vadd.f32 %v789, 1.0
    %v854 = vadd.f32 %v790, 1.0
    %v855 = vadd.f32 %v791, 1.0
    %v856 = vadd.f32 %v792, 1.0
    %v857 = vadd.f32 %v793, 1.0
    %v858 = vadd.f32 %v794, 1.0
    %v859 = vadd.f32 %v795, 1.0
    %v860 = vadd.f32 %v796, 1.0
    %v861 = vadd.f32 %v797, 1.0
    %v862 = vadd.f32 %v798, 1.0
    %v863 = vmul.f32 %v671, %v799
    %v864 = vmul.f32 %v672, %v800
    %v865 = vmul.f32 %v673, %v801
    %v866 = vmul.f32 %v674, %v802
    %v867 = vmul.f32 %v675, %v803
    %v868 = vmul.f32 %v676, %v804
    %v869 = vmul.f32 %v677, %v805
    %v870 = vmul.f32 %v678, %v806
    %v871 = vmul.f32 %v679, %v807
    %v872 = vmul.f32 %v680, %v808
    %v873 = vmul.f32 %v681, %v809
    %v874 = vmul.f32 %v682, %v810
    %v875 = vmul.f32 %v683, %v811
    %v876 = vmul.f32 %v684, %v812
    %v877 = vmul.f32 %v685, %v813
    %v878 = vmul.f32 %v686, %v814
    %v879 = vmul.f32 %v687, %v815
    %v880 = vmul.f32 %v688, %v816
    %v881 = vmul.f32 %v689, %v817
    %v882 = vmul.f32 %v690, %v818
    %v883 = vmul.f32 %v691, %v819
    %v884 = vmul.f32 %v692, %v820
    %v885 = vmul.f32 %v693, %v821
    %v886 = vmul.f32 %v694, %v822
    %v887 = vmul.f32 %v695, %v823
    %v888 = vmul.f32 %v696, %v824
    %v889 = vmul.f32 %v697, %v825
    %v890 = vmul.f32 %v698, %v826
    %v891 = vmul.f32 %v699, %v827
    %v892 = vmul.f32 %v700, %v828
    %v893 = vmul.f32 %v701, %v829
    %v894 = vmul.f32 %v702, %v830
    %v895 = vmul.f32 %v703, %v831
    %v896 = vmul.f32 %v704, %v832
    %v897 = vmul.f32 %v705, %v833
    %v898 = vmul.f32 %v706, %v834
    %v899 = vmul.f32 %v707, %v835
    %v900 = vmul.f32 %v708, %v836
    %v901 = vmul.f32 %v709, %v837
    %v902 = vmul.f32 %v710, %v838
    %v903 = vmul.f32 %v711, %v839
    %v904 = vmul.f32 %v712, %v840
    %v905 = vmul.f32 %v713, %v841
    %v906 = vmul.f32 %v714, %v842
    %v907 = vmul.f32 %v715, %v843
    %v908 = vmul.f32 %v716, %v844
    %v909 = vmul.f32 %v717, %v845
    %v910 = vmul.f32 %v718, %v846
    %v911 = vmul.f32 %v719, %v847
    %v912 = vmul.f32 %v720, %v848
    %v913 = vmul.f32 %v721, %v849
    %v914 = vmul.f32 %v722, %v850
    %v915 = vmul.f32 %v723, %v851
    %v916 = vmul.f32 %v724, %v852
    %v917 = vmul.f32 %v725, %v853
    %v918 = vmul.f32 %v726, %v854
    %v919 = vmul.f32 %v727, %v855
    %v920 = vmul.f32 %v728, %v856
    %v921 = vmul.f32 %v729, %v857
    %v922 = vmul.f32 %v730, %v858
    %v923 = vmul.f32 %v731, %v859
    %v924 = vmul.f32 %v732, %v860
    %v925 = vmul.f32 %v733, %v861
    %v926 = vmul.f32 %v734, %v862
    %v927 = vxor.u32 %v863, 2147483648
    %v928 = vxor.u32 %v864, 2147483648
    %v929 = vxor.u32 %v865, 2147483648
    %v930 = vxor.u32 %v866, 2147483648
    %v931 = vxor.u32 %v867, 2147483648
    %v932 = vxor.u32 %v868, 2147483648
    %v933 = vxor.u32 %v869, 2147483648
    %v934 = vxor.u32 %v870, 2147483648
    %v935 = vxor.u32 %v871, 2147483648
    %v936 = vxor.u32 %v872, 2147483648
    %v937 = vxor.u32 %v873, 2147483648
    %v938 = vxor.u32 %v874, 2147483648
    %v939 = vxor.u32 %v875, 2147483648
    %v940 = vxor.u32 %v876, 2147483648
    %v941 = vxor.u32 %v877, 2147483648
    %v942 = vxor.u32 %v878, 2147483648
    %v943 = vxor.u32 %v879, 2147483648
    %v944 = vxor.u32 %v880, 2147483648
    %v945 = vxor.u32 %v881, 2147483648
    %v946 = vxor.u32 %v882, 2147483648
    %v947 = vxor.u32 %v883, 2147483648
    %v948 = vxor.u32 %v884, 2147483648
    %v949 = vxor.u32 %v885, 2147483648
    %v950 = vxor.u32 %v886, 2147483648
    %v951 = vxor.u32 %v887, 2147483648
    %v952 = vxor.u32 %v888, 2147483648
    %v953 = vxor.u32 %v889, 2147483648
    %v954 = vxor.u32 %v890, 2147483648
    %v955 = vxor.u32 %v891, 2147483648
    %v956 = vxor.u32 %v892, 2147483648
    %v957 = vxor.u32 %v893, 2147483648
    %v958 = vxor.u32 %v894, 2147483648
    %v959 = vxor.u32 %v895, 2147483648
    %v960 = vxor.u32 %v896, 2147483648
    %v961 = vxor.u32 %v897, 2147483648
    %v962 = vxor.u32 %v898, 2147483648
    %v963 = vxor.u32 %v899, 2147483648
    %v964 = vxor.u32 %v900, 2147483648
    %v965 = vxor.u32 %v901, 2147483648
    %v966 = vxor.u32 %v902, 2147483648
    %v967 = vxor.u32 %v903, 2147483648
    %v968 = vxor.u32 %v904, 2147483648
    %v969 = vxor.u32 %v905, 2147483648
    %v970 = vxor.u32 %v906, 2147483648
    %v971 = vxor.u32 %v907, 2147483648
    %v972 = vxor.u32 %v908, 2147483648
    %v973 = vxor.u32 %v909, 2147483648
    %v974 = vxor.u32 %v910, 2147483648
    %v975 = vxor.u32 %v911, 2147483648
    %v976 = vxor.u32 %v912, 2147483648
    %v977 = vxor.u32 %v913, 2147483648
    %v978 = vxor.u32 %v914, 2147483648
    %v979 = vxor.u32 %v915, 2147483648
    %v980 = vxor.u32 %v916, 2147483648
    %v981 = vxor.u32 %v917, 2147483648
    %v982 = vxor.u32 %v918, 2147483648
    %v983 = vxor.u32 %v919, 2147483648
    %v984 = vxor.u32 %v920, 2147483648
    %v985 = vxor.u32 %v921, 2147483648
    %v986 = vxor.u32 %v922, 2147483648
    %v987 = vxor.u32 %v923, 2147483648
    %v988 = vxor.u32 %v924, 2147483648
    %v989 = vxor.u32 %v925, 2147483648
    %v990 = vxor.u32 %v926, 2147483648
    %v991 = vmul.f32 %v927, 1.442695
    %v992 = vpow.pop %v991
    %v993 = vmul.f32 %v928, 1.442695
    %v994 = vpow.pop %v993
    %v995 = vmul.f32 %v929, 1.442695
    %v996 = vpow.pop %v995
    %v997 = vmul.f32 %v930, 1.442695
    %v998 = vpow.pop %v997
    %v999 = vmul.f32 %v931, 1.442695
    %v1000 = vpow.pop %v999
    %v1001 = vmul.f32 %v932, 1.442695
    %v1002 = vpow.pop %v1001
    %v1003 = vmul.f32 %v933, 1.442695
    %v1004 = vpow.pop %v1003
    %v1005 = vmul.f32 %v934, 1.442695
    %v1006 = vpow.pop %v1005
    %v1007 = vmul.f32 %v935, 1.442695
    %v1008 = vpow.pop %v1007
    %v1009 = vmul.f32 %v936, 1.442695
    %v1010 = vpow.pop %v1009
    %v1011 = vmul.f32 %v937, 1.442695
    %v1012 = vpow.pop %v1011
    %v1013 = vmul.f32 %v938, 1.442695
    %v1014 = vpow.pop %v1013
    %v1015 = vmul.f32 %v939, 1.442695
    %v1016 = vpow.pop %v1015
    %v1017 = vmul.f32 %v940, 1.442695
    %v1018 = vpow.pop %v1017
    %v1019 = vmul.f32 %v941, 1.442695
    %v1020 = vpow.pop %v1019
    %v1021 = vmul.f32 %v942, 1.442695
    %v1022 = vpow.pop %v1021
    %v1023 = vmul.f32 %v943, 1.442695
    %v1024 = vpow.pop %v1023
    %v1025 = vmul.f32 %v944, 1.442695
    %v1026 = vpow.pop %v1025
    %v1027 = vmul.f32 %v945, 1.442695
    %v1028 = vpow.pop %v1027
    %v1029 = vmul.f32 %v946, 1.442695
    %v1030 = vpow.pop %v1029
    %v1031 = vmul.f32 %v947, 1.442695
    %v1032 = vpow.pop %v1031
    %v1033 = vmul.f32 %v948, 1.442695
    %v1034 = vpow.pop %v1033
    %v1035 = vmul.f32 %v949, 1.442695
    %v1036 = vpow.pop %v1035
    %v1037 = vmul.f32 %v950, 1.442695
    %v1038 = vpow.pop %v1037
    %v1039 = vmul.f32 %v951, 1.442695
    %v1040 = vpow.pop %v1039
    %v1041 = vmul.f32 %v952, 1.442695
    %v1042 = vpow.pop %v1041
    %v1043 = vmul.f32 %v953, 1.442695
    %v1044 = vpow.pop %v1043
    %v1045 = vmul.f32 %v954, 1.442695
    %v1046 = vpow.pop %v1045
    %v1047 = vmul.f32 %v955, 1.442695
    %v1048 = vpow.pop %v1047
    %v1049 = vmul.f32 %v956, 1.442695
    %v1050 = vpow.pop %v1049
    %v1051 = vmul.f32 %v957, 1.442695
    %v1052 = vpow.pop %v1051
    %v1053 = vmul.f32 %v958, 1.442695
    %v1054 = vpow.pop %v1053
    %v1055 = vmul.f32 %v959, 1.442695
    %v1056 = vpow.pop %v1055
    %v1057 = vmul.f32 %v960, 1.442695
    %v1058 = vpow.pop %v1057
    %v1059 = vmul.f32 %v961, 1.442695
    %v1060 = vpow.pop %v1059
    %v1061 = vmul.f32 %v962, 1.442695
    %v1062 = vpow.pop %v1061
    %v1063 = vmul.f32 %v963, 1.442695
    %v1064 = vpow.pop %v1063
    %v1065 = vmul.f32 %v964, 1.442695
    %v1066 = vpow.pop %v1065
    %v1067 = vmul.f32 %v965, 1.442695
    %v1068 = vpow.pop %v1067
    %v1069 = vmul.f32 %v966, 1.442695
    %v1070 = vpow.pop %v1069
    %v1071 = vmul.f32 %v967, 1.442695
    %v1072 = vpow.pop %v1071
    %v1073 = vmul.f32 %v968, 1.442695
    %v1074 = vpow.pop %v1073
    %v1075 = vmul.f32 %v969, 1.442695
    %v1076 = vpow.pop %v1075
    %v1077 = vmul.f32 %v970, 1.442695
    %v1078 = vpow.pop %v1077
    %v1079 = vmul.f32 %v971, 1.442695
    %v1080 = vpow.pop %v1079
    %v1081 = vmul.f32 %v972, 1.442695
    %v1082 = vpow.pop %v1081
    %v1083 = vmul.f32 %v973, 1.442695
    %v1084 = vpow.pop %v1083
    %v1085 = vmul.f32 %v974, 1.442695
    %v1086 = vpow.pop %v1085
    %v1087 = vmul.f32 %v975, 1.442695
    %v1088 = vpow.pop %v1087
    %v1089 = vmul.f32 %v976, 1.442695
    %v1090 = vpow.pop %v1089
    %v1091 = vmul.f32 %v977, 1.442695
    %v1092 = vpow.pop %v1091
    %v1093 = vmul.f32 %v978, 1.442695
    %v1094 = vpow.pop %v1093
    %v1095 = vmul.f32 %v979, 1.442695
    %v1096 = vpow.pop %v1095
    %v1097 = vmul.f32 %v980, 1.442695
    %v1098 = vpow.pop %v1097
    %v1099 = vmul.f32 %v981, 1.442695
    %v1100 = vpow.pop %v1099
    %v1101 = vmul.f32 %v982, 1.442695
    %v1102 = vpow.pop %v1101
    %v1103 = vmul.f32 %v983, 1.442695
    %v1104 = vpow.pop %v1103
    %v1105 = vmul.f32 %v984, 1.442695
    %v1106 = vpow.pop %v1105
    %v1107 = vmul.f32 %v985, 1.442695
    %v1108 = vpow.pop %v1107
    %v1109 = vmul.f32 %v986, 1.442695
    %v1110 = vpow.pop %v1109
    %v1111 = vmul.f32 %v987, 1.442695
    %v1112 = vpow.pop %v1111
    %v1113 = vmul.f32 %v988, 1.442695
    %v1114 = vpow.pop %v1113
    %v1115 = vmul.f32 %v989, 1.442695
    %v1116 = vpow.pop %v1115
    %v1117 = vmul.f32 %v990, 1.442695
    %v1118 = vpow.pop %v1117
    %v1119 = vadd.f32 %v992, 1.0
    %v1120 = vadd.f32 %v994, 1.0
    %v1121 = vadd.f32 %v996, 1.0
    %v1122 = vadd.f32 %v998, 1.0
    %v1123 = vadd.f32 %v1000, 1.0
    %v1124 = vadd.f32 %v1002, 1.0
    %v1125 = vadd.f32 %v1004, 1.0
    %v1126 = vadd.f32 %v1006, 1.0
    %v1127 = vadd.f32 %v1008, 1.0
    %v1128 = vadd.f32 %v1010, 1.0
    %v1129 = vadd.f32 %v1012, 1.0
    %v1130 = vadd.f32 %v1014, 1.0
    %v1131 = vadd.f32 %v1016, 1.0
    %v1132 = vadd.f32 %v1018, 1.0
    %v1133 = vadd.f32 %v1020, 1.0
    %v1134 = vadd.f32 %v1022, 1.0
    %v1135 = vadd.f32 %v1024, 1.0
    %v1136 = vadd.f32 %v1026, 1.0
    %v1137 = vadd.f32 %v1028, 1.0
    %v1138 = vadd.f32 %v1030, 1.0
    %v1139 = vadd.f32 %v1032, 1.0
    %v1140 = vadd.f32 %v1034, 1.0
    %v1141 = vadd.f32 %v1036, 1.0
    %v1142 = vadd.f32 %v1038, 1.0
    %v1143 = vadd.f32 %v1040, 1.0
    %v1144 = vadd.f32 %v1042, 1.0
    %v1145 = vadd.f32 %v1044, 1.0
    %v1146 = vadd.f32 %v1046, 1.0
    %v1147 = vadd.f32 %v1048, 1.0
    %v1148 = vadd.f32 %v1050, 1.0
    %v1149 = vadd.f32 %v1052, 1.0
    %v1150 = vadd.f32 %v1054, 1.0
    %v1151 = vadd.f32 %v1056, 1.0
    %v1152 = vadd.f32 %v1058, 1.0
    %v1153 = vadd.f32 %v1060, 1.0
    %v1154 = vadd.f32 %v1062, 1.0
    %v1155 = vadd.f32 %v1064, 1.0
    %v1156 = vadd.f32 %v1066, 1.0
    %v1157 = vadd.f32 %v1068, 1.0
    %v1158 = vadd.f32 %v1070, 1.0
    %v1159 = vadd.f32 %v1072, 1.0
    %v1160 = vadd.f32 %v1074, 1.0
    %v1161 = vadd.f32 %v1076, 1.0
    %v1162 = vadd.f32 %v1078, 1.0
    %v1163 = vadd.f32 %v1080, 1.0
    %v1164 = vadd.f32 %v1082, 1.0
    %v1165 = vadd.f32 %v1084, 1.0
    %v1166 = vadd.f32 %v1086, 1.0
    %v1167 = vadd.f32 %v1088, 1.0
    %v1168 = vadd.f32 %v1090, 1.0
    %v1169 = vadd.f32 %v1092, 1.0
    %v1170 = vadd.f32 %v1094, 1.0
    %v1171 = vadd.f32 %v1096, 1.0
    %v1172 = vadd.f32 %v1098, 1.0
    %v1173 = vadd.f32 %v1100, 1.0
    %v1174 = vadd.f32 %v1102, 1.0
    %v1175 = vadd.f32 %v1104, 1.0
    %v1176 = vadd.f32 %v1106, 1.0
    %v1177 = vadd.f32 %v1108, 1.0
    %v1178 = vadd.f32 %v1110, 1.0
    %v1179 = vadd.f32 %v1112, 1.0
    %v1180 = vadd.f32 %v1114, 1.0
    %v1181 = vadd.f32 %v1116, 1.0
    %v1182 = vadd.f32 %v1118, 1.0
    %v1183 = vrcp.pop %v1119
    %v1184 = vmul.f32 1.0, %v1183
    %v1185 = vrcp.pop %v1120
    %v1186 = vmul.f32 1.0, %v1185
    %v1187 = vrcp.pop %v1121
    %v1188 = vmul.f32 1.0, %v1187
    %v1189 = vrcp.pop %v1122
    %v1190 = vmul.f32 1.0, %v1189
    %v1191 = vrcp.pop %v1123
    %v1192 = vmul.f32 1.0, %v1191
    %v1193 = vrcp.pop %v1124
    %v1194 = vmul.f32 1.0, %v1193
    %v1195 = vrcp.pop %v1125
    %v1196 = vmul.f32 1.0, %v1195
    %v1197 = vrcp.pop %v1126
    %v1198 = vmul.f32 1.0, %v1197
    %v1199 = vrcp.pop %v1127
    %v1200 = vmul.f32 1.0, %v1199
    %v1201 = vrcp.pop %v1128
    %v1202 = vmul.f32 1.0, %v1201
    %v1203 = vrcp.pop %v1129
    %v1204 = vmul.f32 1.0, %v1203
    %v1205 = vrcp.pop %v1130
    %v1206 = vmul.f32 1.0, %v1205
    %v1207 = vrcp.pop %v1131
    %v1208 = vmul.f32 1.0, %v1207
    %v1209 = vrcp.pop %v1132
    %v1210 = vmul.f32 1.0, %v1209
    %v1211 = vrcp.pop %v1133
    %v1212 = vmul.f32 1.0, %v1211
    %v1213 = vrcp.pop %v1134
    %v1214 = vmul.f32 1.0, %v1213
    %v1215 = vrcp.pop %v1135
    %v1216 = vmul.f32 1.0, %v1215
    %v1217 = vrcp.pop %v1136
    %v1218 = vmul.f32 1.0, %v1217
    %v1219 = vrcp.pop %v1137
    %v1220 = vmul.f32 1.0, %v1219
    %v1221 = vrcp.pop %v1138
    %v1222 = vmul.f32 1.0, %v1221
    %v1223 = vrcp.pop %v1139
    %v1224 = vmul.f32 1.0, %v1223
    %v1225 = vrcp.pop %v1140
    %v1226 = vmul.f32 1.0, %v1225
    %v1227 = vrcp.pop %v1141
    %v1228 = vmul.f32 1.0, %v1227
    %v1229 = vrcp.pop %v1142
    %v1230 = vmul.f32 1.0, %v1229
    %v1231 = vrcp.pop %v1143
    %v1232 = vmul.f32 1.0, %v1231
    %v1233 = vrcp.pop %v1144
    %v1234 = vmul.f32 1.0, %v1233
    %v1235 = vrcp.pop %v1145
    %v1236 = vmul.f32 1.0, %v1235
    %v1237 = vrcp.pop %v1146
    %v1238 = vmul.f32 1.0, %v1237
    %v1239 = vrcp.pop %v1147
    %v1240 = vmul.f32 1.0, %v1239
    %v1241 = vrcp.pop %v1148
    %v1242 = vmul.f32 1.0, %v1241
    %v1243 = vrcp.pop %v1149
    %v1244 = vmul.f32 1.0, %v1243
    %v1245 = vrcp.pop %v1150
    %v1246 = vmul.f32 1.0, %v1245
    %v1247 = vrcp.pop %v1151
    %v1248 = vmul.f32 1.0, %v1247
    %v1249 = vrcp.pop %v1152
    %v1250 = vmul.f32 1.0, %v1249
    %v1251 = vrcp.pop %v1153
    %v1252 = vmul.f32 1.0, %v1251
    %v1253 = vrcp.pop %v1154
    %v1254 = vmul.f32 1.0, %v1253
    %v1255 = vrcp.pop %v1155
    %v1256 = vmul.f32 1.0, %v1255
    %v1257 = vrcp.pop %v1156
    %v1258 = vmul.f32 1.0, %v1257
    %v1259 = vrcp.pop %v1157
    %v1260 = vmul.f32 1.0, %v1259
    %v1261 = vrcp.pop %v1158
    %v1262 = vmul.f32 1.0, %v1261
    %v1263 = vrcp.pop %v1159
    %v1264 = vmul.f32 1.0, %v1263
    %v1265 = vrcp.pop %v1160
    %v1266 = vmul.f32 1.0, %v1265
    %v1267 = vrcp.pop %v1161
    %v1268 = vmul.f32 1.0, %v1267
    %v1269 = vrcp.pop %v1162
    %v1270 = vmul.f32 1.0, %v1269
    %v1271 = vrcp.pop %v1163
    %v1272 = vmul.f32 1.0, %v1271
    %v1273 = vrcp.pop %v1164
    %v1274 = vmul.f32 1.0, %v1273
    %v1275 = vrcp.pop %v1165
    %v1276 = vmul.f32 1.0, %v1275
    %v1277 = vrcp.pop %v1166
    %v1278 = vmul.f32 1.0, %v1277
    %v1279 = vrcp.pop %v1167
    %v1280 = vmul.f32 1.0, %v1279
    %v1281 = vrcp.pop %v1168
    %v1282 = vmul.f32 1.0, %v1281
    %v1283 = vrcp.pop %v1169
    %v1284 = vmul.f32 1.0, %v1283
    %v1285 = vrcp.pop %v1170
    %v1286 = vmul.f32 1.0, %v1285
    %v1287 = vrcp.pop %v1171
    %v1288 = vmul.f32 1.0, %v1287
    %v1289 = vrcp.pop %v1172
    %v1290 = vmul.f32 1.0, %v1289
    %v1291 = vrcp.pop %v1173
    %v1292 = vmul.f32 1.0, %v1291
    %v1293 = vrcp.pop %v1174
    %v1294 = vmul.f32 1.0, %v1293
    %v1295 = vrcp.pop %v1175
    %v1296 = vmul.f32 1.0, %v1295
    %v1297 = vrcp.pop %v1176
    %v1298 = vmul.f32 1.0, %v1297
    %v1299 = vrcp.pop %v1177
    %v1300 = vmul.f32 1.0, %v1299
    %v1301 = vrcp.pop %v1178
    %v1302 = vmul.f32 1.0, %v1301
    %v1303 = vrcp.pop %v1179
    %v1304 = vmul.f32 1.0, %v1303
    %v1305 = vrcp.pop %v1180
    %v1306 = vmul.f32 1.0, %v1305
    %v1307 = vrcp.pop %v1181
    %v1308 = vmul.f32 1.0, %v1307
    %v1309 = vrcp.pop %v1182
    %v1310 = vmul.f32 1.0, %v1309
    %v1311 = vmul.f32 %v416, %v1184
    %v1312 = vmul.f32 %v418, %v1186
    %v1313 = vmul.f32 %v529, %v1188
    %v1314 = vmul.f32 %v531, %v1190
    %v1315 = vmul.f32 %v420, %v1192
    %v1316 = vmul.f32 %v422, %v1194
    %v1317 = vmul.f32 %v533, %v1196
    %v1318 = vmul.f32 %v535, %v1198
    %v1319 = vmul.f32 %v426, %v1200
    %v1320 = vmul.f32 %v428, %v1202
    %v1321 = vmul.f32 %v539, %v1204
    %v1322 = vmul.f32 %v541, %v1206
    %v1323 = vmul.f32 %v430, %v1208
    %v1324 = vmul.f32 %v432, %v1210
    %v1325 = vmul.f32 %v543, %v1212
    %v1326 = vmul.f32 %v545, %v1214
    %v1327 = vmul.f32 %v436, %v1216
    %v1328 = vmul.f32 %v438, %v1218
    %v1329 = vmul.f32 %v549, %v1220
    %v1330 = vmul.f32 %v551, %v1222
    %v1331 = vmul.f32 %v440, %v1224
    %v1332 = vmul.f32 %v442, %v1226
    %v1333 = vmul.f32 %v553, %v1228
    %v1334 = vmul.f32 %v555, %v1230
    %v1335 = vmul.f32 %v446, %v1232
    %v1336 = vmul.f32 %v448, %v1234
    %v1337 = vmul.f32 %v559, %v1236
    %v1338 = vmul.f32 %v561, %v1238
    %v1339 = vmul.f32 %v450, %v1240
    %v1340 = vmul.f32 %v452, %v1242
    %v1341 = vmul.f32 %v563, %v1244
    %v1342 = vmul.f32 %v565, %v1246
    %v1343 = vmul.f32 %v456, %v1248
    %v1344 = vmul.f32 %v458, %v1250
    %v1345 = vmul.f32 %v569, %v1252
    %v1346 = vmul.f32 %v571, %v1254
    %v1347 = vmul.f32 %v460, %v1256
    %v1348 = vmul.f32 %v462, %v1258
    %v1349 = vmul.f32 %v573, %v1260
    %v1350 = vmul.f32 %v575, %v1262
    %v1351 = vmul.f32 %v466, %v1264
    %v1352 = vmul.f32 %v468, %v1266
    %v1353 = vmul.f32 %v579, %v1268
    %v1354 = vmul.f32 %v581, %v1270
    %v1355 = vmul.f32 %v470, %v1272
    %v1356 = vmul.f32 %v472, %v1274
    %v1357 = vmul.f32 %v583, %v1276
    %v1358 = vmul.f32 %v585, %v1278
    %v1359 = vmul.f32 %v476, %v1280
    %v1360 = vmul.f32 %v478, %v1282
    %v1361 = vmul.f32 %v589, %v1284
    %v1362 = vmul.f32 %v591, %v1286
    %v1363 = vmul.f32 %v480, %v1288
    %v1364 = vmul.f32 %v482, %v1290
    %v1365 = vmul.f32 %v593, %v1292
    %v1366 = vmul.f32 %v595, %v1294
    %v1367 = vmul.f32 %v486, %v1296
    %v1368 = vmul.f32 %v488, %v1298
    %v1369 = vmul.f32 %v599, %v1300
    %v1370 = vmul.f32 %v601, %v1302
    %v1371 = vmul.f32 %v490, %v1304
    %v1372 = vmul.f32 %v492, %v1306
    %v1373 = vmul.f32 %v603, %v1308
    %v1374 = vmul.f32 %v605, %v1310
    %v1375 = vpack.c.bf16 %v1315, %v1311
    %v1376 = vpack.c.bf16 %v1316, %v1312
    %v1377 = vpack.c.bf16 %v1317, %v1313
    %v1378 = vpack.c.bf16 %v1318, %v1314
    %v1379 = vpack.c.bf16 %v1323, %v1319
    %v1380 = vpack.c.bf16 %v1324, %v1320
    %v1381 = vpack.c.bf16 %v1325, %v1321
    %v1382 = vpack.c.bf16 %v1326, %v1322
    %v1383 = vpack.c.bf16 %v1331, %v1327
    %v1384 = vpack.c.bf16 %v1332, %v1328
    %v1385 = vpack.c.bf16 %v1333, %v1329
    %v1386 = vpack.c.bf16 %v1334, %v1330
    %v1387 = vpack.c.bf16 %v1339, %v1335
    %v1388 = vpack.c.bf16 %v1340, %v1336
    %v1389 = vpack.c.bf16 %v1341, %v1337
    %v1390 = vpack.c.bf16 %v1342, %v1338
    %v1391 = vpack.c.bf16 %v1347, %v1343
    %v1392 = vpack.c.bf16 %v1348, %v1344
    %v1393 = vpack.c.bf16 %v1349, %v1345
    %v1394 = vpack.c.bf16 %v1350, %v1346
    %v1395 = vpack.c.bf16 %v1355, %v1351
    %v1396 = vpack.c.bf16 %v1356, %v1352
    %v1397 = vpack.c.bf16 %v1357, %v1353
    %v1398 = vpack.c.bf16 %v1358, %v1354
    %v1399 = vpack.c.bf16 %v1363, %v1359
    %v1400 = vpack.c.bf16 %v1364, %v1360
    %v1401 = vpack.c.bf16 %v1365, %v1361
    %v1402 = vpack.c.bf16 %v1366, %v1362
    %v1403 = vpack.c.bf16 %v1371, %v1367
    %v1404 = vpack.c.bf16 %v1372, %v1368
    %v1405 = vpack.c.bf16 %v1373, %v1369
    %v1406 = vpack.c.bf16 %v1374, %v1370
    %v1407 = vld [vmem:[#allocation8] sm:$0xf]
    %v1408 = vld [vmem:[#allocation8 + $0x4] sm:$0xf]
    %v1409 = vld [vmem:[#allocation8 + $0x8] sm:$0xf]
    %v1410 = vld [vmem:[#allocation8 + $0xc] sm:$0xf]
    %v1411 = vld [vmem:[#allocation8 + $0x10] sm:$0xf]
    %v1412 = vld [vmem:[#allocation8 + $0x14] sm:$0xf]
    %v1413 = vld [vmem:[#allocation8 + $0x18] sm:$0xf]
    %v1414 = vld [vmem:[#allocation8 + $0x1c] sm:$0xf]
    %v1415 = vld [vmem:[#allocation8 + $0x20] sm:$0xf]
    %v1416 = vld [vmem:[#allocation8 + $0x24] sm:$0xf]
    %v1417 = vld [vmem:[#allocation8 + $0x28] sm:$0xf]
    %v1418 = vld [vmem:[#allocation8 + $0x2c] sm:$0xf]
    %v1419 = vld [vmem:[#allocation8 + $0x30] sm:$0xf]
    %v1420 = vld [vmem:[#allocation8 + $0x34] sm:$0xf]
    %v1421 = vld [vmem:[#allocation8 + $0x38] sm:$0xf]
    %v1422 = vld [vmem:[#allocation8 + $0x3c] sm:$0xf]
    %v1423 = vld [vmem:[#allocation8 + $0x40] sm:$0xf]
    %v1424 = vld [vmem:[#allocation8 + $0x44] sm:$0xf]
    %v1425 = vld [vmem:[#allocation8 + $0x48] sm:$0xf]
    %v1426 = vld [vmem:[#allocation8 + $0x4c] sm:$0xf]
    %v1427 = vld [vmem:[#allocation8 + $0x50] sm:$0xf]
    %v1428 = vld [vmem:[#allocation8 + $0x54] sm:$0xf]
    %v1429 = vld [vmem:[#allocation8 + $0x58] sm:$0xf]
    %v1430 = vld [vmem:[#allocation8 + $0x5c] sm:$0xf]
    %v1431 = vld [vmem:[#allocation8 + $0x60] sm:$0xf]
    %v1432 = vld [vmem:[#allocation8 + $0x64] sm:$0xf]
    %v1433 = vld [vmem:[#allocation8 + $0x68] sm:$0xf]
    %v1434 = vld [vmem:[#allocation8 + $0x6c] sm:$0xf]
    %v1435 = vld [vmem:[#allocation8 + $0x70] sm:$0xf]
    %v1436 = vld [vmem:[#allocation8 + $0x74] sm:$0xf]
    %v1437 = vld [vmem:[#allocation8 + $0x78] sm:$0xf]
    %v1438 = vld [vmem:[#allocation8 + $0x7c] sm:$0xf]
    %v1439 = vld [vmem:[#allocation8 + $0x80] sm:$0xf]
    %v1440 = vld [vmem:[#allocation8 + $0x84] sm:$0xf]
    %v1441 = vld [vmem:[#allocation8 + $0x88] sm:$0xf]
    %v1442 = vld [vmem:[#allocation8 + $0x8c] sm:$0xf]
    %v1443 = vld [vmem:[#allocation8 + $0x90] sm:$0xf]
    %v1444 = vld [vmem:[#allocation8 + $0x94] sm:$0xf]
    %v1445 = vld [vmem:[#allocation8 + $0x98] sm:$0xf]
    %v1446 = vld [vmem:[#allocation8 + $0x9c] sm:$0xf]
    %v1447 = vld [vmem:[#allocation8 + $0xa0] sm:$0xf]
    %v1448 = vld [vmem:[#allocation8 + $0xa4] sm:$0xf]
    %v1449 = vld [vmem:[#allocation8 + $0xa8] sm:$0xf]
    %v1450 = vld [vmem:[#allocation8 + $0xac] sm:$0xf]
    %v1451 = vld [vmem:[#allocation8 + $0xb0] sm:$0xf]
    %v1452 = vld [vmem:[#allocation8 + $0xb4] sm:$0xf]
    %v1453 = vld [vmem:[#allocation8 + $0xb8] sm:$0xf]
    %v1454 = vld [vmem:[#allocation8 + $0xbc] sm:$0xf]
    %v1455 = vld [vmem:[#allocation8 + $0xc0] sm:$0xf]
    %v1456 = vld [vmem:[#allocation8 + $0xc4] sm:$0xf]
    %v1457 = vld [vmem:[#allocation8 + $0xc8] sm:$0xf]
    %v1458 = vld [vmem:[#allocation8 + $0xcc] sm:$0xf]
    %v1459 = vld [vmem:[#allocation8 + $0xd0] sm:$0xf]
    %v1460 = vld [vmem:[#allocation8 + $0xd4] sm:$0xf]
    %v1461 = vld [vmem:[#allocation8 + $0xd8] sm:$0xf]
    %v1462 = vld [vmem:[#allocation8 + $0xdc] sm:$0xf]
    %v1463 = vld [vmem:[#allocation8 + $0xe0] sm:$0xf]
    %v1464 = vld [vmem:[#allocation8 + $0xe4] sm:$0xf]
    %v1465 = vld [vmem:[#allocation8 + $0xe8] sm:$0xf]
    %v1466 = vld [vmem:[#allocation8 + $0xec] sm:$0xf]
    %v1467 = vld [vmem:[#allocation8 + $0xf0] sm:$0xf]
    %v1468 = vld [vmem:[#allocation8 + $0xf4] sm:$0xf]
    %v1469 = vld [vmem:[#allocation8 + $0xf8] sm:$0xf]
    %v1470 = vld [vmem:[#allocation8 + $0xfc] sm:$0xf]
    %v1471 = vld [vmem:[#allocation10] sm:$0x1]
    %v1472 = vunpack.c.l.bf16 %v1471
    %v1473 = vlaneseq
    %v1474 = vshrl.u32 %v1473, 7
    %v1475 = vsub.s32 0, %v1474
    %v1476 = vrot.slane %v1472, %v1475
    %v1541 = vunpack.c.l.b16 %v1407
    %v1542 = vunpack.c.l.b16 %v1408
    %v1543 = vunpack.c.l.b16 %v1409
    %v1544 = vunpack.c.l.b16 %v1410
    %v1545 = vunpack.c.l.b16 %v1411
    %v1546 = vunpack.c.l.b16 %v1412
    %v1547 = vunpack.c.l.b16 %v1413
    %v1548 = vunpack.c.l.b16 %v1414
    %v1549 = vunpack.c.l.b16 %v1415
    %v1550 = vunpack.c.l.b16 %v1416
    %v1551 = vunpack.c.l.b16 %v1417
    %v1552 = vunpack.c.l.b16 %v1418
    %v1553 = vunpack.c.l.b16 %v1419
    %v1554 = vunpack.c.l.b16 %v1420
    %v1555 = vunpack.c.l.b16 %v1421
    %v1556 = vunpack.c.l.b16 %v1422
    %v1557 = vunpack.c.l.b16 %v1423
    %v1558 = vunpack.c.l.b16 %v1424
    %v1559 = vunpack.c.l.b16 %v1425
    %v1560 = vunpack.c.l.b16 %v1426
    %v1561 = vunpack.c.l.b16 %v1427
    %v1562 = vunpack.c.l.b16 %v1428
    %v1563 = vunpack.c.l.b16 %v1429
    %v1564 = vunpack.c.l.b16 %v1430
    %v1565 = vunpack.c.l.b16 %v1431
    %v1566 = vunpack.c.l.b16 %v1432
    %v1567 = vunpack.c.l.b16 %v1433
    %v1568 = vunpack.c.l.b16 %v1434
    %v1569 = vunpack.c.l.b16 %v1435
    %v1570 = vunpack.c.l.b16 %v1436
    %v1571 = vunpack.c.l.b16 %v1437
    %v1572 = vunpack.c.l.b16 %v1438
    %v1573 = vunpack.c.l.b16 %v1439
    %v1574 = vunpack.c.l.b16 %v1440
    %v1575 = vunpack.c.l.b16 %v1441
    %v1576 = vunpack.c.l.b16 %v1442
    %v1577 = vunpack.c.l.b16 %v1443
    %v1578 = vunpack.c.l.b16 %v1444
    %v1579 = vunpack.c.l.b16 %v1445
    %v1580 = vunpack.c.l.b16 %v1446
    %v1581 = vunpack.c.l.b16 %v1447
    %v1582 = vunpack.c.l.b16 %v1448
    %v1583 = vunpack.c.l.b16 %v1449
    %v1584 = vunpack.c.l.b16 %v1450
    %v1585 = vunpack.c.l.b16 %v1451
    %v1586 = vunpack.c.l.b16 %v1452
    %v1587 = vunpack.c.l.b16 %v1453
    %v1588 = vunpack.c.l.b16 %v1454
    %v1589 = vunpack.c.l.b16 %v1455
    %v1590 = vunpack.c.l.b16 %v1456
    %v1591 = vunpack.c.l.b16 %v1457
    %v1592 = vunpack.c.l.b16 %v1458
    %v1593 = vunpack.c.l.b16 %v1459
    %v1594 = vunpack.c.l.b16 %v1460
    %v1595 = vunpack.c.l.b16 %v1461
    %v1596 = vunpack.c.l.b16 %v1462
    %v1597 = vunpack.c.l.b16 %v1463
    %v1598 = vunpack.c.l.b16 %v1464
    %v1599 = vunpack.c.l.b16 %v1465
    %v1600 = vunpack.c.l.b16 %v1466
    %v1601 = vunpack.c.l.b16 %v1467
    %v1602 = vunpack.c.l.b16 %v1468
    %v1603 = vunpack.c.l.b16 %v1469
    %v1604 = vunpack.c.l.b16 %v1470
    %v1605 = vpack.c.b16 %v1542, %v1541
    %v1606 = vpack.c.b16 %v1544, %v1543
    %v1607 = vpack.c.b16 %v1546, %v1545
    %v1608 = vpack.c.b16 %v1548, %v1547
    %v1609 = vpack.c.b16 %v1550, %v1549
    %v1610 = vpack.c.b16 %v1552, %v1551
    %v1611 = vpack.c.b16 %v1554, %v1553
    %v1612 = vpack.c.b16 %v1556, %v1555
    %v1613 = vpack.c.b16 %v1558, %v1557
    %v1614 = vpack.c.b16 %v1560, %v1559
    %v1615 = vpack.c.b16 %v1562, %v1561
    %v1616 = vpack.c.b16 %v1564, %v1563
    %v1617 = vpack.c.b16 %v1566, %v1565
    %v1618 = vpack.c.b16 %v1568, %v1567
    %v1619 = vpack.c.b16 %v1570, %v1569
    %v1620 = vpack.c.b16 %v1572, %v1571
    %v1621 = vpack.c.b16 %v1574, %v1573
    %v1622 = vpack.c.b16 %v1576, %v1575
    %v1623 = vpack.c.b16 %v1578, %v1577
    %v1624 = vpack.c.b16 %v1580, %v1579
    %v1625 = vpack.c.b16 %v1582, %v1581
    %v1626 = vpack.c.b16 %v1584, %v1583
    %v1627 = vpack.c.b16 %v1586, %v1585
    %v1628 = vpack.c.b16 %v1588, %v1587
    %v1629 = vpack.c.b16 %v1590, %v1589
    %v1630 = vpack.c.b16 %v1592, %v1591
    %v1631 = vpack.c.b16 %v1594, %v1593
    %v1632 = vpack.c.b16 %v1596, %v1595
    %v1633 = vpack.c.b16 %v1598, %v1597
    %v1634 = vpack.c.b16 %v1600, %v1599
    %v1635 = vpack.c.b16 %v1602, %v1601
    %v1636 = vpack.c.b16 %v1604, %v1603
    %1669 = vmatprep.subr.bf16.mxu0 0
    %1670 = vmatpush1.bf16.msra.mxu0 %v1605
    %1671 = vmatprep.subr.bf16.mxu0 0
    %1672 = vmatpush1.bf16.msra.mxu0 %v1606
    %1673 = vmatprep.subr.bf16.mxu0 0
    %1674 = vmatpush1.bf16.msra.mxu0 %v1607
    %1675 = vmatprep.subr.bf16.mxu0 0
    %1676 = vmatpush1.bf16.msra.mxu0 %v1608
    %1677 = vmatprep.subr.bf16.mxu0 0
    %1678 = vmatpush1.bf16.msra.mxu0 %v1609
    %1679 = vmatprep.subr.bf16.mxu0 0
    %1680 = vmatpush1.bf16.msra.mxu0 %v1610
    %1681 = vmatprep.subr.bf16.mxu0 0
    %1682 = vmatpush1.bf16.msra.mxu0 %v1611
    %1683 = vmatprep.subr.bf16.mxu0 0
    %1684 = vmatpush1.bf16.msra.mxu0 %v1612
    %1685 = vmatprep.subr.bf16.mxu0 0
    %1686 = vmatpush1.bf16.msra.mxu0 %v1613
    %1687 = vmatprep.subr.bf16.mxu0 0
    %1688 = vmatpush1.bf16.msra.mxu0 %v1614
    %1689 = vmatprep.subr.bf16.mxu0 0
    %1690 = vmatpush1.bf16.msra.mxu0 %v1615
    %1691 = vmatprep.subr.bf16.mxu0 0
    %1692 = vmatpush1.bf16.msra.mxu0 %v1616
    %1693 = vmatprep.subr.bf16.mxu0 0
    %1694 = vmatpush1.bf16.msra.mxu0 %v1617
    %1695 = vmatprep.subr.bf16.mxu0 0
    %1696 = vmatpush1.bf16.msra.mxu0 %v1618
    %1697 = vmatprep.subr.bf16.mxu0 0
    %1698 = vmatpush1.bf16.msra.mxu0 %v1619
    %1699 = vmatprep.subr.bf16.mxu0 0
    %1700 = vmatpush1.bf16.msra.mxu0 %v1620
    %1701 = vmatprep.mubr.bf16.mxu0 %v1376
    %1702 = vmatmul.mubr.bf16.gmra.mrb[0].mxu0 %v1375
    %v1703 = vpop.f32.mrb[0].mxu0
    %v1704 = vadd.f32 %v1476, %v1703
    %v1705 = vpop.f32.mrb[0].mxu0
    %v1706 = vpop.f32.mrb[0].mxu0
    %v1707 = vadd.f32 %v1476, %v1706
    %v1708 = vpop.f32.mrb[0].mxu0
    %1709 = vmatprep.mubr.bf16.mxu0 %v1380
    %1710 = vmatmul.mubr.bf16.gmra.mrb[0].mxu0 %v1379
    %v1711 = vpop.f32.mrb[0].mxu0
    %v1712 = vadd.f32 %v1476, %v1711
    %v1713 = vpop.f32.mrb[0].mxu0
    %v1714 = vpop.f32.mrb[0].mxu0
    %v1715 = vadd.f32 %v1476, %v1714
    %v1716 = vpop.f32.mrb[0].mxu0
    %1717 = vmatprep.mubr.bf16.mxu0 %v1384
    %1718 = vmatmul.mubr.bf16.gmra.mrb[0].mxu0 %v1383
    %v1719 = vpop.f32.mrb[0].mxu0
    %v1720 = vadd.f32 %v1476, %v1719
    %v1721 = vpop.f32.mrb[0].mxu0
    %v1722 = vpop.f32.mrb[0].mxu0
    %v1723 = vadd.f32 %v1476, %v1722
    %v1724 = vpop.f32.mrb[0].mxu0
    %1725 = vmatprep.mubr.bf16.mxu0 %v1388
    %1726 = vmatmul.mubr.bf16.gmra.mrb[0].mxu0 %v1387
    %v1727 = vpop.f32.mrb[0].mxu0
    %v1728 = vadd.f32 %v1476, %v1727
    %v1729 = vpop.f32.mrb[0].mxu0
    %v1730 = vpop.f32.mrb[0].mxu0
    %v1731 = vadd.f32 %v1476, %v1730
    %v1732 = vpop.f32.mrb[0].mxu0
    %1733 = vmatprep.mubr.bf16.mxu0 %v1392
    %1734 = vmatmul.mubr.bf16.gmra.mrb[0].mxu0 %v1391
    %v1735 = vpop.f32.mrb[0].mxu0
    %v1736 = vadd.f32 %v1476, %v1735
    %v1737 = vpop.f32.mrb[0].mxu0
    %v1738 = vpop.f32.mrb[0].mxu0
    %v1739 = vadd.f32 %v1476, %v1738
    %v1740 = vpop.f32.mrb[0].mxu0
    %1741 = vmatprep.mubr.bf16.mxu0 %v1396
    %1742 = vmatmul.mubr.bf16.gmra.mrb[0].mxu0 %v1395
    %v1743 = vpop.f32.mrb[0].mxu0
    %v1744 = vadd.f32 %v1476, %v1743
    %v1745 = vpop.f32.mrb[0].mxu0
    %v1746 = vpop.f32.mrb[0].mxu0
    %v1747 = vadd.f32 %v1476, %v1746
    %v1748 = vpop.f32.mrb[0].mxu0
    %1749 = vmatprep.mubr.bf16.mxu0 %v1400
    %1750 = vmatmul.mubr.bf16.gmra.mrb[0].mxu0 %v1399
    %v1751 = vpop.f32.mrb[0].mxu0
    %v1752 = vadd.f32 %v1476, %v1751
    %v1753 = vpop.f32.mrb[0].mxu0
    %v1754 = vpop.f32.mrb[0].mxu0
    %v1755 = vadd.f32 %v1476, %v1754
    %v1756 = vpop.f32.mrb[0].mxu0
    %1757 = vmatprep.mubr.bf16.mxu0 %v1404
    %1758 = vmatmul.mubr.bf16.gmra.mrb[0].mxu0 %v1403
    %v1759 = vpop.f32.mrb[0].mxu0
    %v1760 = vadd.f32 %v1476, %v1759
    %v1761 = vpop.f32.mrb[0].mxu0
    %v1762 = vpop.f32.mrb[0].mxu0
    %v1763 = vadd.f32 %v1476, %v1762
    %v1764 = vpop.f32.mrb[0].mxu0
    %1765 = vdwg.mxu0
    %1766 = vmatprep.subr.bf16.mxu0 0
    %1767 = vmatpush1.bf16.msra.mxu0 %v1621
    %1768 = vmatprep.subr.bf16.mxu0 0
    %1769 = vmatpush1.bf16.msra.mxu0 %v1622
    %1770 = vmatprep.subr.bf16.mxu0 0
    %1771 = vmatpush1.bf16.msra.mxu0 %v1623
    %1772 = vmatprep.subr.bf16.mxu0 0
    %1773 = vmatpush1.bf16.msra.mxu0 %v1624
    %1774 = vmatprep.subr.bf16.mxu0 0
    %1775 = vmatpush1.bf16.msra.mxu0 %v1625
    %1776 = vmatprep.subr.bf16.mxu0 0
    %1777 = vmatpush1.bf16.msra.mxu0 %v1626
    %1778 = vmatprep.subr.bf16.mxu0 0
    %1779 = vmatpush1.bf16.msra.mxu0 %v1627
    %1780 = vmatprep.subr.bf16.mxu0 0
    %1781 = vmatpush1.bf16.msra.mxu0 %v1628
    %1782 = vmatprep.subr.bf16.mxu0 0
    %1783 = vmatpush1.bf16.msra.mxu0 %v1629
    %1784 = vmatprep.subr.bf16.mxu0 0
    %1785 = vmatpush1.bf16.msra.mxu0 %v1630
    %1786 = vmatprep.subr.bf16.mxu0 0
    %1787 = vmatpush1.bf16.msra.mxu0 %v1631
    %1788 = vmatprep.subr.bf16.mxu0 0
    %1789 = vmatpush1.bf16.msra.mxu0 %v1632
    %1790 = vmatprep.subr.bf16.mxu0 0
    %1791 = vmatpush1.bf16.msra.mxu0 %v1633
    %1792 = vmatprep.subr.bf16.mxu0 0
    %1793 = vmatpush1.bf16.msra.mxu0 %v1634
    %1794 = vmatprep.subr.bf16.mxu0 0
    %1795 = vmatpush1.bf16.msra.mxu0 %v1635
    %1796 = vmatprep.subr.bf16.mxu0 0
    %1797 = vmatpush1.bf16.msra.mxu0 %v1636
    %1798 = vmatprep.mubr.bf16.mxu0 %v1378
    %1799 = vmatmul.mubr.bf16.gmra.mrb[0].mxu0 %v1377
    %v1800 = vpop.f32.mrb[0].mxu0
    %v1801 = vadd.f32 %v1704, %v1800
    %v1802 = vpop.f32.mrb[0].mxu0
    %v1803 = vpop.f32.mrb[0].mxu0
    %v1804 = vadd.f32 %v1707, %v1803
    %v1805 = vpop.f32.mrb[0].mxu0
    %1806 = vmatprep.mubr.bf16.mxu0 %v1382
    %1807 = vmatmul.mubr.bf16.gmra.mrb[0].mxu0 %v1381
    %v1808 = vpop.f32.mrb[0].mxu0
    %v1809 = vadd.f32 %v1712, %v1808
    %v1810 = vpop.f32.mrb[0].mxu0
    %v1811 = vpop.f32.mrb[0].mxu0
    %v1812 = vadd.f32 %v1715, %v1811
    %v1813 = vpop.f32.mrb[0].mxu0
    %1814 = vmatprep.mubr.bf16.mxu0 %v1386
    %1815 = vmatmul.mubr.bf16.gmra.mrb[0].mxu0 %v1385
    %v1816 = vpop.f32.mrb[0].mxu0
    %v1817 = vadd.f32 %v1720, %v1816
    %v1818 = vpop.f32.mrb[0].mxu0
    %v1819 = vpop.f32.mrb[0].mxu0
    %v1820 = vadd.f32 %v1723, %v1819
    %v1821 = vpop.f32.mrb[0].mxu0
    %1822 = vmatprep.mubr.bf16.mxu0 %v1390
    %1823 = vmatmul.mubr.bf16.gmra.mrb[0].mxu0 %v1389
    %v1824 = vpop.f32.mrb[0].mxu0
    %v1825 = vadd.f32 %v1728, %v1824
    %v1826 = vpop.f32.mrb[0].mxu0
    %v1827 = vpop.f32.mrb[0].mxu0
    %v1828 = vadd.f32 %v1731, %v1827
    %v1829 = vpop.f32.mrb[0].mxu0
    %1830 = vmatprep.mubr.bf16.mxu0 %v1394
    %1831 = vmatmul.mubr.bf16.gmra.mrb[0].mxu0 %v1393
    %v1832 = vpop.f32.mrb[0].mxu0
    %v1833 = vadd.f32 %v1736, %v1832
    %v1834 = vpop.f32.mrb[0].mxu0
    %v1835 = vpop.f32.mrb[0].mxu0
    %v1836 = vadd.f32 %v1739, %v1835
    %v1837 = vpop.f32.mrb[0].mxu0
    %1838 = vmatprep.mubr.bf16.mxu0 %v1398
    %1839 = vmatmul.mubr.bf16.gmra.mrb[0].mxu0 %v1397
    %v1840 = vpop.f32.mrb[0].mxu0
    %v1841 = vadd.f32 %v1744, %v1840
    %v1842 = vpop.f32.mrb[0].mxu0
    %v1843 = vpop.f32.mrb[0].mxu0
    %v1844 = vadd.f32 %v1747, %v1843
    %v1845 = vpop.f32.mrb[0].mxu0
    %1846 = vmatprep.mubr.bf16.mxu0 %v1402
    %1847 = vmatmul.mubr.bf16.gmra.mrb[0].mxu0 %v1401
    %v1848 = vpop.f32.mrb[0].mxu0
    %v1849 = vadd.f32 %v1752, %v1848
    %v1850 = vpop.f32.mrb[0].mxu0
    %v1851 = vpop.f32.mrb[0].mxu0
    %v1852 = vadd.f32 %v1755, %v1851
    %v1853 = vpop.f32.mrb[0].mxu0
    %1854 = vmatprep.mubr.bf16.mxu0 %v1406
    %1855 = vmatmul.mubr.bf16.gmra.mrb[0].mxu0 %v1405
    %v1856 = vpop.f32.mrb[0].mxu0
    %v1857 = vadd.f32 %v1760, %v1856
    %v1858 = vpop.f32.mrb[0].mxu0
    %v1859 = vpop.f32.mrb[0].mxu0
    %v1860 = vadd.f32 %v1763, %v1859
    %v1861 = vpop.f32.mrb[0].mxu0
    %1862 = vdwg.mxu0
    %v1863 = vpack.c.bf16 %v1804, %v1801
    %v1864 = vpack.c.bf16 %v1812, %v1809
    %v1865 = vpack.c.bf16 %v1820, %v1817
    %v1866 = vpack.c.bf16 %v1828, %v1825
    %v1867 = vpack.c.bf16 %v1836, %v1833
    %v1868 = vpack.c.bf16 %v1844, %v1841
    %v1869 = vpack.c.bf16 %v1852, %v1849
    %v1870 = vpack.c.bf16 %v1860, %v1857
    %v1879 = vunpack.c.l.b16 %v1863
    %v1880 = vunpack.c.h.b16 %v1863
    %v1881 = vunpack.c.l.b16 %v1864
    %v1882 = vunpack.c.h.b16 %v1864
    %v1883 = vunpack.c.l.b16 %v1865
    %v1884 = vunpack.c.h.b16 %v1865
    %v1885 = vunpack.c.l.b16 %v1866
    %v1886 = vunpack.c.h.b16 %v1866
    %v1887 = vunpack.c.l.b16 %v1867
    %v1888 = vunpack.c.h.b16 %v1867
    %v1889 = vunpack.c.l.b16 %v1868
    %v1890 = vunpack.c.h.b16 %v1868
    %v1891 = vunpack.c.l.b16 %v1869
    %v1892 = vunpack.c.h.b16 %v1869
    %v1893 = vunpack.c.l.b16 %v1870
    %v1894 = vunpack.c.h.b16 %v1870
    %v1895 = vpack.c.b16 %v1879, %v1879
    %v1896 = vpack.c.b16 %v1880, %v1880
    %v1897 = vpack.c.b16 %v1881, %v1881
    %v1898 = vpack.c.b16 %v1882, %v1882
    %v1899 = vpack.c.b16 %v1883, %v1883
    %v1900 = vpack.c.b16 %v1884, %v1884
    %v1901 = vpack.c.b16 %v1885, %v1885
    %v1902 = vpack.c.b16 %v1886, %v1886
    %v1903 = vpack.c.b16 %v1887, %v1887
    %v1904 = vpack.c.b16 %v1888, %v1888
    %v1905 = vpack.c.b16 %v1889, %v1889
    %v1906 = vpack.c.b16 %v1890, %v1890
    %v1907 = vpack.c.b16 %v1891, %v1891
    %v1908 = vpack.c.b16 %v1892, %v1892
    %v1909 = vpack.c.b16 %v1893, %v1893
    %v1910 = vpack.c.b16 %v1894, %v1894
    %1927 = vst [vmem:[#allocation11] sm:$0xf] %v1895
    %1928 = vst [vmem:[#allocation11 + $0x4] sm:$0xf] %v1896
    %1929 = vst [vmem:[#allocation11 + $0x8] sm:$0xf] %v1897
    %1930 = vst [vmem:[#allocation11 + $0xc] sm:$0xf] %v1898
    %1931 = vst [vmem:[#allocation11 + $0x10] sm:$0xf] %v1899
    %1932 = vst [vmem:[#allocation11 + $0x14] sm:$0xf] %v1900
    %1933 = vst [vmem:[#allocation11 + $0x18] sm:$0xf] %v1901
    %1934 = vst [vmem:[#allocation11 + $0x1c] sm:$0xf] %v1902
    %1935 = vst [vmem:[#allocation11 + $0x20] sm:$0xf] %v1903
    %1936 = vst [vmem:[#allocation11 + $0x24] sm:$0xf] %v1904
    %1937 = vst [vmem:[#allocation11 + $0x28] sm:$0xf] %v1905
    %1938 = vst [vmem:[#allocation11 + $0x2c] sm:$0xf] %v1906
    %1939 = vst [vmem:[#allocation11 + $0x30] sm:$0xf] %v1907
    %1940 = vst [vmem:[#allocation11 + $0x34] sm:$0xf] %v1908
    %1941 = vst [vmem:[#allocation11 + $0x38] sm:$0xf] %v1909
    %1942 = vst [vmem:[#allocation11 + $0x3c] sm:$0xf] %v1910
    // Predicated region
    $region42: #{tpu_custom_call.1} parent=1 // pred_check
      _
    $region43: #{tpu_custom_call.1} parent=1 // pred_check_branch
      %1944 = sbr.rel (0) target = $region45
    $region44: #{tpu_custom_call.1} parent=1 // pred_region
      %s1946 = ssub.s32 1024, 1024
      %1947 = vsyncadd [#allocation4], %s1946
      %s1948 = sshll.u32 [#allocation11], 4
      %s1949 = int_to_ptr.vmem [resolvable:$true] %s1948
      %1954 = dma.vmem_to_hbm [thread:$0]  %s1949, 1024, %s5, [#allocation4], 64, 64, 4
    $region45: #{tpu_custom_call.1} parent=1 // pred_fallthru
      _
    // Predicated region
    $region46: #{tpu_custom_call.1} parent=1 // pred_check
      _
    $region47: #{tpu_custom_call.1} parent=1 // pred_check_branch
      %1956 = sbr.rel (0) target = $region49
    $region48: #{tpu_custom_call.1} parent=1 // pred_region
      %1957 = dma.done [#allocation4], 1024
    $region49: #{tpu_custom_call.1} parent=1 // pred_fallthru
      _
    %1958 = vsyncpa [#allocation3], 1
    %1959 = vsyncpa [#allocation6], 1
    %1960 = vsyncpa [#allocation9], 1
    %1961 = vsyncpa [#allocation4], 1

</llo_original>
